<compile_context>
chip_gen: v7x
topology: tpu7x:2x2x1
jax: 0.10.0
libtpu: 0.0.40
codegen_flags: <defaults>
</compile_context>

<pallas_src>
import functools

import jax
import jax.numpy as jnp
from jax.experimental import pallas as pl
from jax.experimental.pallas import tpu as pltpu

BN_EPS = 1e-5     # PyTorch F.batch_norm default
OUT_PAD = 128     # lane-dense output slab width (true feature dim is 64)


def _round_up(a, b):
    return (a + b - 1) // b * b


def _finalize_stats(stat_ref, g_ref, be_ref, inv_n):
    """Convert accumulated (sum z, sum z^2) rows into (scale, shift) in place."""
    mean = stat_ref[0:1, :] * inv_n
    ex2 = stat_ref[1:2, :] * inv_n
    var = jnp.maximum(ex2 - mean * mean, 0.0)       # clamp guards cancellation
    scale = g_ref[...] * jax.lax.rsqrt(var + BN_EPS)
    shift = be_ref[...] - mean * scale
    stat_ref[0:1, :] = scale
    stat_ref[1:2, :] = shift


def _accumulate_stats(z, stat_ref):
    """Accumulate sum(z) / sum(z^2) over the tile rows; reductions on the MXU."""
    ones_row = jnp.ones((1, z.shape[0]), jnp.float32)
    stat_ref[0:1, :] = stat_ref[0:1, :] + jnp.dot(
        ones_row, z, preferred_element_type=jnp.float32)
    stat_ref[1:2, :] = stat_ref[1:2, :] + jnp.dot(
        ones_row, z * z, preferred_element_type=jnp.float32)


def _apply_bn_relu(z, stat_ref, dtype, row_mask):
    """relu(z*scale + shift) with scale/shift read from finalized stats."""
    scale = stat_ref[0:1, :].astype(dtype)
    shift = stat_ref[1:2, :].astype(dtype)
    h = jnp.maximum(z.astype(dtype) * scale + shift, jnp.zeros((), dtype))
    if row_mask is not None:
        # Zero-padded batch rows must stay exactly zero so later layers'
        # batch statistics remain exact.
        h = jnp.where(row_mask, h, jnp.zeros((), dtype))
    return h


def _feature_extractor_kernel(
    x_ref,
    w1_ref, g1_ref, be1_ref,
    w2_ref, g2_ref, be2_ref,
    w3_ref, g3_ref, be3_ref,
    o_ref,
    stat1, stat2, stat3,
    *, n_true, tile_m, needs_mask,
):
    phase = pl.program_id(0)
    m = pl.program_id(1)
    inv_n = 1.0 / float(n_true)
    cdt = w1_ref.dtype   # matmul / hidden-activation dtype (bf16 on v6e/v7x)

    # ---- init / per-phase finalize (first tile of each phase) --------------
    @pl.when(jnp.logical_and(phase == 0, m == 0))
    def _init():
        stat1[...] = jnp.zeros_like(stat1)
        stat2[...] = jnp.zeros_like(stat2)
        stat3[...] = jnp.zeros_like(stat3)

    @pl.when(jnp.logical_and(phase == 1, m == 0))
    def _fin1():
        _finalize_stats(stat1, g1_ref, be1_ref, inv_n)

    @pl.when(jnp.logical_and(phase == 2, m == 0))
    def _fin2():
        _finalize_stats(stat2, g2_ref, be2_ref, inv_n)

    @pl.when(jnp.logical_and(phase == 3, m == 0))
    def _fin3():
        _finalize_stats(stat3, g3_ref, be3_ref, inv_n)

    if needs_mask:
        rows = jax.lax.broadcasted_iota(jnp.int32, (tile_m, 1), 0) + m * tile_m
        row_mask = rows < n_true
    else:
        row_mask = None

    x = x_ref[...]

    # Bias-free linears (biases cancelled exactly by training-mode BN).
    def z1():
        return jnp.dot(x, w1_ref[...], preferred_element_type=jnp.float32)

    def h1():
        return _apply_bn_relu(z1(), stat1, cdt, row_mask)

    def z2():
        return jnp.dot(h1(), w2_ref[...], preferred_element_type=jnp.float32)

    def h2():
        return _apply_bn_relu(z2(), stat2, cdt, row_mask)

    def z3():
        return jnp.dot(h2(), w3_ref[...], preferred_element_type=jnp.float32)

    @pl.when(phase == 0)
    def _p0():
        _accumulate_stats(z1(), stat1)

    @pl.when(phase == 1)
    def _p1():
        _accumulate_stats(z2(), stat2)

    @pl.when(phase == 2)
    def _p2():
        _accumulate_stats(z3(), stat3)

    @pl.when(phase == 3)
    def _p3():
        o_ref[...] = _apply_bn_relu(z3(), stat3, jnp.float32, None)


def prepare_params(params, matmul_dtype=jnp.bfloat16):
    """One-time prep OUTSIDE the hot path: transpose Linear weights
    (out,in)->(in,out), cast to the MXU operand dtype, reshape BN gamma/beta to
    (1, C) f32 rows, and zero-pad the last layer from 64 to 128 features so the
    kernel's output stores are lane-dense.  Linear biases are dropped on
    purpose (training-mode BN cancels them).  On v5e prefer matmul_dtype=f32."""
    def row(v, pad_to=None):
        r = v.reshape(1, -1).astype(jnp.float32)
        if pad_to is not None and r.shape[1] < pad_to:
            r = jnp.pad(r, ((0, 0), (0, pad_to - r.shape[1])))
        return r

    w3 = params["w3"].T.astype(matmul_dtype)                   # (128, 64)
    w3 = jnp.pad(w3, ((0, 0), (0, OUT_PAD - w3.shape[1])))     # (128, 128)
    return (
        params["w1"].T.astype(matmul_dtype), row(params["g1"]), row(params["be1"]),
        params["w2"].T.astype(matmul_dtype), row(params["g2"]), row(params["be2"]),
        w3, row(params["g3"], OUT_PAD), row(params["be3"], OUT_PAD),
    )


def feature_extractor_forward(x, kernel_params, *, tile_m=256):
    """x: (N, input_dim) f32; kernel_params: output of prepare_params().
    tile_m: MXU-aligned batch tile (256 for v6e/v7x, 128 for v5e)."""
    (w1, g1, be1, w2, g2, be2, w3, g3, be3) = kernel_params
    n, k0 = x.shape
    cdt = w1.dtype

    tm = int(max(8, min(tile_m, _round_up(n, 8))))
    n_pad = _round_up(n, tm)
    num_m = n_pad // tm

    xp = x.astype(cdt)                       # halve x DMA bytes when bf16
    if n_pad != n:
        xp = jnp.pad(xp, ((0, n_pad - n), (0, 0)))   # zero rows; masked in-kernel

    kernel = functools.partial(
        _feature_extractor_kernel, n_true=n, tile_m=tm, needs_mask=(n_pad != n))

    const_map = lambda p, m: (0, 0)
    in_specs = [pl.BlockSpec((tm, k0), lambda p, m: (m, 0))]
    in_specs += [pl.BlockSpec(a.shape, const_map)
                 for a in (w1, g1, be1, w2, g2, be2, w3, g3, be3)]
    # Output only materializes in the final phase; keep its block pinned at 0
    # during the stats phases so no stale writebacks occur.
    out_specs = pl.BlockSpec(
        (tm, OUT_PAD), lambda p, m: (jnp.where(p == 3, m, 0), 0))

    out = pl.pallas_call(
        kernel,
        out_shape=jax.ShapeDtypeStruct((n_pad, OUT_PAD), jnp.float32),
        grid=(4, num_m),
        in_specs=in_specs,
        out_specs=out_specs,
        scratch_shapes=[
            pltpu.VMEM((2, 256), jnp.float32),       # layer-1 sums -> scale/shift
            pltpu.VMEM((2, 128), jnp.float32),       # layer-2
            pltpu.VMEM((2, OUT_PAD), jnp.float32),   # layer-3 (padded to 128)
        ],
        # Phases are sequential; BN stats are a cross-tile reduction, so the
        # batch axis must also stay "arbitrary" (no megacore split).
        compiler_params=pltpu.CompilerParams(
            dimension_semantics=("arbitrary", "arbitrary")),
    )(xp, w1, g1, be1, w2, g2, be2, w3, g3, be3)

    return out[:n, :64]


def init_params(input_dim, key):
    """Deterministic init mirroring the PyTorch __init__ (kaiming_normal_, zeros, ones)."""
    k1, k2, k3 = jax.random.split(key, 3)

    def kaiming(k, out_f, in_f):
        std = (2.0 / in_f) ** 0.5     # fan_in mode, gain = sqrt(2)
        return jax.random.normal(k, (out_f, in_f), dtype=jnp.float32) * std

    return {
        "w1": kaiming(k1, 256, input_dim), "b1": jnp.zeros((256,), jnp.float32),
        "g1": jnp.ones((256,), jnp.float32), "be1": jnp.zeros((256,), jnp.float32),
        "w2": kaiming(k2, 128, 256), "b2": jnp.zeros((128,), jnp.float32),
        "g2": jnp.ones((128,), jnp.float32), "be2": jnp.zeros((128,), jnp.float32),
        "w3": kaiming(k3, 64, 128), "b3": jnp.zeros((64,), jnp.float32),
        "g3": jnp.ones((64,), jnp.float32), "be3": jnp.zeros((64,), jnp.float32),
    }


def reference_forward(x, p, matmul_dtype=jnp.float32):
    """Pure-JAX reference of the PyTorch forward (training-mode BN, WITH the
    Linear biases and two-pass variance)."""
    def layer(h, w, b, g, be):
        z = jnp.dot(h.astype(matmul_dtype), w.T.astype(matmul_dtype),
                    preferred_element_type=jnp.float32) + b
        mean = jnp.mean(z, axis=0, keepdims=True)
        var = jnp.mean((z - mean) ** 2, axis=0, keepdims=True)   # biased var
        zh = (z - mean) / jnp.sqrt(var + BN_EPS)
        return jnp.maximum(zh * g + be, 0.0)

    h = layer(x, p["w1"], p["b1"], p["g1"], p["be1"])
    h = layer(h, p["w2"], p["b2"], p["g2"], p["be2"])
    h = layer(h, p["w3"], p["b3"], p["g3"], p["be3"])
    return h


if __name__ == "__main__":
    key = jax.random.PRNGKey(0)
    k_x, k_x2, k_p, k_b = jax.random.split(key, 4)

    input_dim = 32
    params = init_params(input_dim, k_p)

    # Perturb biases / BN affine params away from the trivial init so the
    # bias-cancellation and folded-affine paths are actually exercised.
    kb = jax.random.split(k_b, 9)
    params["b1"] = 0.1 * jax.random.normal(kb[0], (256,), jnp.float32)
    params["b2"] = 0.1 * jax.random.normal(kb[1], (128,), jnp.float32)
    params["b3"] = 0.1 * jax.random.normal(kb[2], (64,), jnp.float32)
    params["g1"] = 1.0 + 0.1 * jax.random.normal(kb[3], (256,), jnp.float32)
    params["g2"] = 1.0 + 0.1 * jax.random.normal(kb[4], (128,), jnp.float32)
    params["g3"] = 1.0 + 0.1 * jax.random.normal(kb[5], (64,), jnp.float32)
    params["be1"] = 0.1 * jax.random.normal(kb[6], (256,), jnp.float32)
    params["be2"] = 0.1 * jax.random.normal(kb[7], (128,), jnp.float32)
    params["be3"] = 0.1 * jax.random.normal(kb[8], (64,), jnp.float32)

    # --- case 1: tiny batch (single tile), f32 MXU operands, tight check ----
    x_small = jax.random.normal(k_x, (8, input_dim), dtype=jnp.float32)
    kp_f32 = prepare_params(params, matmul_dtype=jnp.float32)
    out = jax.block_until_ready(feature_extractor_forward(x_small, kp_f32))
    ref = reference_forward(x_small, params, matmul_dtype=jnp.float32)
    assert out.shape == (8, 64), out.shape
    assert jnp.allclose(out, ref, atol=2e-3, rtol=2e-3), "f32 small-batch mismatch"

    # --- case 2: multi-tile batch with zero-padding / row masking, f32 ------
    x_big = jax.random.normal(k_x2, (100, input_dim), dtype=jnp.float32)
    out = jax.block_until_ready(
        feature_extractor_forward(x_big, kp_f32, tile_m=32))
    ref = reference_forward(x_big, params, matmul_dtype=jnp.float32)
    assert out.shape == (100, 64), out.shape
    assert jnp.allclose(out, ref, atol=2e-3, rtol=2e-3), "f32 multi-tile mismatch"

    # --- case 3: bf16 MXU operands + bf16 hidden activations (v6e/v7x path) -
    kp_bf16 = prepare_params(params, matmul_dtype=jnp.bfloat16)
    out = jax.block_until_ready(
        feature_extractor_forward(x_big, kp_bf16, tile_m=32))
    ref = reference_forward(x_big, params, matmul_dtype=jnp.bfloat16)
    assert out.shape == (100, 64), out.shape
    assert jnp.allclose(out, ref, atol=3e-2, rtol=3e-2), "bf16 mismatch"

    print("KERNEL_OK")
</pallas_src>

<mosaic_0001>
module attributes {stable_mosaic.version = 11 : i64} {
  func.func @_feature_extractor_kernel(%arg0: i32, %arg1: i32, %arg2: memref<8x32xf32, #tpu.memory_space<vmem>>, %arg3: memref<32x256xf32, #tpu.memory_space<vmem>>, %arg4: memref<1x256xf32, #tpu.memory_space<vmem>>, %arg5: memref<1x256xf32, #tpu.memory_space<vmem>>, %arg6: memref<256x128xf32, #tpu.memory_space<vmem>>, %arg7: memref<1x128xf32, #tpu.memory_space<vmem>>, %arg8: memref<1x128xf32, #tpu.memory_space<vmem>>, %arg9: memref<128x128xf32, #tpu.memory_space<vmem>>, %arg10: memref<1x128xf32, #tpu.memory_space<vmem>>, %arg11: memref<1x128xf32, #tpu.memory_space<vmem>>, %arg12: memref<8x128xf32, #tpu.memory_space<vmem>>, %arg13: memref<2x256xf32, #tpu.memory_space<vmem>>, %arg14: memref<2x128xf32, #tpu.memory_space<vmem>>, %arg15: memref<2x128xf32, #tpu.memory_space<vmem>>) attributes {dimension_semantics = [#tpu.dimension_semantics<arbitrary>, #tpu.dimension_semantics<arbitrary>], iteration_bounds = array<i64: 4, 1>, scalar_prefetch = 0 : i64, scratch_operands = 3 : i64, tpu.core_type = #tpu.core_type<tc>, window_params = [{transform_indices = @transform_0, window_bounds = array<i64: 8, 32>}, {pipeline_mode = #tpu.pipeline_mode<synchronous>, transform_indices = @transform_1, window_bounds = array<i64: 32, 256>}, {pipeline_mode = #tpu.pipeline_mode<synchronous>, transform_indices = @transform_2, window_bounds = array<i64: 1, 256>}, {pipeline_mode = #tpu.pipeline_mode<synchronous>, transform_indices = @transform_3, window_bounds = array<i64: 1, 256>}, {pipeline_mode = #tpu.pipeline_mode<synchronous>, transform_indices = @transform_4, window_bounds = array<i64: 256, 128>}, {pipeline_mode = #tpu.pipeline_mode<synchronous>, transform_indices = @transform_5, window_bounds = array<i64: 1, 128>}, {pipeline_mode = #tpu.pipeline_mode<synchronous>, transform_indices = @transform_6, window_bounds = array<i64: 1, 128>}, {pipeline_mode = #tpu.pipeline_mode<synchronous>, transform_indices = @transform_7, window_bounds = array<i64: 128, 128>}, {pipeline_mode = #tpu.pipeline_mode<synchronous>, transform_indices = @transform_8, window_bounds = array<i64: 1, 128>}, {pipeline_mode = #tpu.pipeline_mode<synchronous>, transform_indices = @transform_9, window_bounds = array<i64: 1, 128>}, {transform_indices = @transform_10, window_bounds = array<i64: 8, 128>}]} {
    %c0_i32 = arith.constant 0 : i32
    %0 = arith.cmpi eq, %arg0, %c0_i32 : i32
    %c0_i32_0 = arith.constant 0 : i32
    %1 = arith.cmpi eq, %arg1, %c0_i32_0 : i32
    %2 = arith.andi %0, %1 : i1
    %3 = arith.extui %2 : i1 to i32
    %c0_i32_1 = arith.constant 0 : i32
    %4 = arith.cmpi ne, %3, %c0_i32_1 : i32
    scf.if %4 {
      %cst = arith.constant 0.000000e+00 : f32
      %33 = vector.broadcast %cst : f32 to vector<2x256xf32>
      %c0_17 = arith.constant 0 : index
      %c0_18 = arith.constant 0 : index
      %34 = vector.load %arg13[%c0_17, %c0_18] : memref<2x256xf32, #tpu.memory_space<vmem>>, vector<2x256xf32>
      tpu.vector_store %arg13[%c0_17, %c0_18], %33 {strides = array<i32>} : memref<2x256xf32, #tpu.memory_space<vmem>>, vector<2x256xf32>,
      %cst_19 = arith.constant 0.000000e+00 : f32
      %35 = vector.broadcast %cst_19 : f32 to vector<2x128xf32>
      %c0_20 = arith.constant 0 : index
      %c0_21 = arith.constant 0 : index
      %36 = vector.load %arg14[%c0_20, %c0_21] : memref<2x128xf32, #tpu.memory_space<vmem>>, vector<2x128xf32>
      tpu.vector_store %arg14[%c0_20, %c0_21], %35 {strides = array<i32>} : memref<2x128xf32, #tpu.memory_space<vmem>>, vector<2x128xf32>,
      %cst_22 = arith.constant 0.000000e+00 : f32
      %37 = vector.broadcast %cst_22 : f32 to vector<2x128xf32>
      %c0_23 = arith.constant 0 : index
      %c0_24 = arith.constant 0 : index
      %38 = vector.load %arg15[%c0_23, %c0_24] : memref<2x128xf32, #tpu.memory_space<vmem>>, vector<2x128xf32>
      tpu.vector_store %arg15[%c0_23, %c0_24], %37 {strides = array<i32>} : memref<2x128xf32, #tpu.memory_space<vmem>>, vector<2x128xf32>,
    } else {
    }
    %c1_i32 = arith.constant 1 : i32
    %5 = arith.cmpi eq, %arg0, %c1_i32 : i32
    %c0_i32_2 = arith.constant 0 : i32
    %6 = arith.cmpi eq, %arg1, %c0_i32_2 : i32
    %7 = arith.andi %5, %6 : i1
    %8 = arith.extui %7 : i1 to i32
    %c0_i32_3 = arith.constant 0 : i32
    %9 = arith.cmpi ne, %8, %c0_i32_3 : i32
    scf.if %9 {
      %c0_17 = arith.constant 0 : index
      %c0_18 = arith.constant 0 : index
      %33 = vector.load %arg13[%c0_17, %c0_18] : memref<2x256xf32, #tpu.memory_space<vmem>>, vector<1x256xf32>
      %cst = arith.constant 1.250000e-01 : f32
      %34 = vector.broadcast %cst : f32 to vector<1x256xf32>
      %35 = arith.mulf %33, %34 : vector<1x256xf32>
      %c1 = arith.constant 1 : index
      %c0_19 = arith.constant 0 : index
      %36 = vector.load %arg13[%c1, %c0_19] : memref<2x256xf32, #tpu.memory_space<vmem>>, vector<1x256xf32>
      %cst_20 = arith.constant 1.250000e-01 : f32
      %37 = vector.broadcast %cst_20 : f32 to vector<1x256xf32>
      %38 = arith.mulf %36, %37 : vector<1x256xf32>
      %39 = arith.mulf %35, %35 : vector<1x256xf32>
      %40 = arith.subf %38, %39 : vector<1x256xf32>
      %cst_21 = arith.constant 0.000000e+00 : f32
      %41 = vector.broadcast %cst_21 : f32 to vector<1x256xf32>
      %42 = arith.maximumf %40, %41 : vector<1x256xf32>
      %c0_22 = arith.constant 0 : index
      %c0_23 = arith.constant 0 : index
      %43 = vector.load %arg4[%c0_22, %c0_23] : memref<1x256xf32, #tpu.memory_space<vmem>>, vector<1x256xf32>
      %cst_24 = arith.constant 9.99999974E-6 : f32
      %44 = vector.broadcast %cst_24 : f32 to vector<1x256xf32>
      %45 = arith.addf %42, %44 : vector<1x256xf32>
      %46 = math.rsqrt %45 : vector<1x256xf32>
      %47 = arith.mulf %43, %46 : vector<1x256xf32>
      %c0_25 = arith.constant 0 : index
      %c0_26 = arith.constant 0 : index
      %48 = vector.load %arg5[%c0_25, %c0_26] : memref<1x256xf32, #tpu.memory_space<vmem>>, vector<1x256xf32>
      %49 = arith.mulf %35, %47 : vector<1x256xf32>
      %50 = arith.subf %48, %49 : vector<1x256xf32>
      %c0_27 = arith.constant 0 : index
      %c0_28 = arith.constant 0 : index
      %51 = vector.load %arg13[%c0_27, %c0_28] : memref<2x256xf32, #tpu.memory_space<vmem>>, vector<1x256xf32>
      tpu.vector_store %arg13[%c0_27, %c0_28], %47 {strides = array<i32>} : memref<2x256xf32, #tpu.memory_space<vmem>>, vector<1x256xf32>,
      %c1_29 = arith.constant 1 : index
      %c0_30 = arith.constant 0 : index
      %52 = vector.load %arg13[%c1_29, %c0_30] : memref<2x256xf32, #tpu.memory_space<vmem>>, vector<1x256xf32>
      tpu.vector_store %arg13[%c1_29, %c0_30], %50 {strides = array<i32>} : memref<2x256xf32, #tpu.memory_space<vmem>>, vector<1x256xf32>,
    } else {
    }
    %c2_i32 = arith.constant 2 : i32
    %10 = arith.cmpi eq, %arg0, %c2_i32 : i32
    %c0_i32_4 = arith.constant 0 : i32
    %11 = arith.cmpi eq, %arg1, %c0_i32_4 : i32
    %12 = arith.andi %10, %11 : i1
    %13 = arith.extui %12 : i1 to i32
    %c0_i32_5 = arith.constant 0 : i32
    %14 = arith.cmpi ne, %13, %c0_i32_5 : i32
    scf.if %14 {
      %c0_17 = arith.constant 0 : index
      %c0_18 = arith.constant 0 : index
      %33 = vector.load %arg14[%c0_17, %c0_18] : memref<2x128xf32, #tpu.memory_space<vmem>>, vector<1x128xf32>
      %cst = arith.constant 1.250000e-01 : f32
      %34 = vector.broadcast %cst : f32 to vector<1x128xf32>
      %35 = arith.mulf %33, %34 : vector<1x128xf32>
      %c1 = arith.constant 1 : index
      %c0_19 = arith.constant 0 : index
      %36 = vector.load %arg14[%c1, %c0_19] : memref<2x128xf32, #tpu.memory_space<vmem>>, vector<1x128xf32>
      %cst_20 = arith.constant 1.250000e-01 : f32
      %37 = vector.broadcast %cst_20 : f32 to vector<1x128xf32>
      %38 = arith.mulf %36, %37 : vector<1x128xf32>
      %39 = arith.mulf %35, %35 : vector<1x128xf32>
      %40 = arith.subf %38, %39 : vector<1x128xf32>
      %cst_21 = arith.constant 0.000000e+00 : f32
      %41 = vector.broadcast %cst_21 : f32 to vector<1x128xf32>
      %42 = arith.maximumf %40, %41 : vector<1x128xf32>
      %c0_22 = arith.constant 0 : index
      %c0_23 = arith.constant 0 : index
      %43 = vector.load %arg7[%c0_22, %c0_23] : memref<1x128xf32, #tpu.memory_space<vmem>>, vector<1x128xf32>
      %cst_24 = arith.constant 9.99999974E-6 : f32
      %44 = vector.broadcast %cst_24 : f32 to vector<1x128xf32>
      %45 = arith.addf %42, %44 : vector<1x128xf32>
      %46 = math.rsqrt %45 : vector<1x128xf32>
      %47 = arith.mulf %43, %46 : vector<1x128xf32>
      %c0_25 = arith.constant 0 : index
      %c0_26 = arith.constant 0 : index
      %48 = vector.load %arg8[%c0_25, %c0_26] : memref<1x128xf32, #tpu.memory_space<vmem>>, vector<1x128xf32>
      %49 = arith.mulf %35, %47 : vector<1x128xf32>
      %50 = arith.subf %48, %49 : vector<1x128xf32>
      %c0_27 = arith.constant 0 : index
      %c0_28 = arith.constant 0 : index
      %51 = vector.load %arg14[%c0_27, %c0_28] : memref<2x128xf32, #tpu.memory_space<vmem>>, vector<1x128xf32>
      tpu.vector_store %arg14[%c0_27, %c0_28], %47 {strides = array<i32>} : memref<2x128xf32, #tpu.memory_space<vmem>>, vector<1x128xf32>,
      %c1_29 = arith.constant 1 : index
      %c0_30 = arith.constant 0 : index
      %52 = vector.load %arg14[%c1_29, %c0_30] : memref<2x128xf32, #tpu.memory_space<vmem>>, vector<1x128xf32>
      tpu.vector_store %arg14[%c1_29, %c0_30], %50 {strides = array<i32>} : memref<2x128xf32, #tpu.memory_space<vmem>>, vector<1x128xf32>,
    } else {
    }
    %c3_i32 = arith.constant 3 : i32
    %15 = arith.cmpi eq, %arg0, %c3_i32 : i32
    %c0_i32_6 = arith.constant 0 : i32
    %16 = arith.cmpi eq, %arg1, %c0_i32_6 : i32
    %17 = arith.andi %15, %16 : i1
    %18 = arith.extui %17 : i1 to i32
    %c0_i32_7 = arith.constant 0 : i32
    %19 = arith.cmpi ne, %18, %c0_i32_7 : i32
    scf.if %19 {
      %c0_17 = arith.constant 0 : index
      %c0_18 = arith.constant 0 : index
      %33 = vector.load %arg15[%c0_17, %c0_18] : memref<2x128xf32, #tpu.memory_space<vmem>>, vector<1x128xf32>
      %cst = arith.constant 1.250000e-01 : f32
      %34 = vector.broadcast %cst : f32 to vector<1x128xf32>
      %35 = arith.mulf %33, %34 : vector<1x128xf32>
      %c1 = arith.constant 1 : index
      %c0_19 = arith.constant 0 : index
      %36 = vector.load %arg15[%c1, %c0_19] : memref<2x128xf32, #tpu.memory_space<vmem>>, vector<1x128xf32>
      %cst_20 = arith.constant 1.250000e-01 : f32
      %37 = vector.broadcast %cst_20 : f32 to vector<1x128xf32>
      %38 = arith.mulf %36, %37 : vector<1x128xf32>
      %39 = arith.mulf %35, %35 : vector<1x128xf32>
      %40 = arith.subf %38, %39 : vector<1x128xf32>
      %cst_21 = arith.constant 0.000000e+00 : f32
      %41 = vector.broadcast %cst_21 : f32 to vector<1x128xf32>
      %42 = arith.maximumf %40, %41 : vector<1x128xf32>
      %c0_22 = arith.constant 0 : index
      %c0_23 = arith.constant 0 : index
      %43 = vector.load %arg10[%c0_22, %c0_23] : memref<1x128xf32, #tpu.memory_space<vmem>>, vector<1x128xf32>
      %cst_24 = arith.constant 9.99999974E-6 : f32
      %44 = vector.broadcast %cst_24 : f32 to vector<1x128xf32>
      %45 = arith.addf %42, %44 : vector<1x128xf32>
      %46 = math.rsqrt %45 : vector<1x128xf32>
      %47 = arith.mulf %43, %46 : vector<1x128xf32>
      %c0_25 = arith.constant 0 : index
      %c0_26 = arith.constant 0 : index
      %48 = vector.load %arg11[%c0_25, %c0_26] : memref<1x128xf32, #tpu.memory_space<vmem>>, vector<1x128xf32>
      %49 = arith.mulf %35, %47 : vector<1x128xf32>
      %50 = arith.subf %48, %49 : vector<1x128xf32>
      %c0_27 = arith.constant 0 : index
      %c0_28 = arith.constant 0 : index
      %51 = vector.load %arg15[%c0_27, %c0_28] : memref<2x128xf32, #tpu.memory_space<vmem>>, vector<1x128xf32>
      tpu.vector_store %arg15[%c0_27, %c0_28], %47 {strides = array<i32>} : memref<2x128xf32, #tpu.memory_space<vmem>>, vector<1x128xf32>,
      %c1_29 = arith.constant 1 : index
      %c0_30 = arith.constant 0 : index
      %52 = vector.load %arg15[%c1_29, %c0_30] : memref<2x128xf32, #tpu.memory_space<vmem>>, vector<1x128xf32>
      tpu.vector_store %arg15[%c1_29, %c0_30], %50 {strides = array<i32>} : memref<2x128xf32, #tpu.memory_space<vmem>>, vector<1x128xf32>,
    } else {
    }
    %c0 = arith.constant 0 : index
    %c0_8 = arith.constant 0 : index
    %20 = vector.load %arg2[%c0, %c0_8] : memref<8x32xf32, #tpu.memory_space<vmem>>, vector<8x32xf32>
    %c0_i32_9 = arith.constant 0 : i32
    %21 = arith.cmpi eq, %arg0, %c0_i32_9 : i32
    %22 = arith.extui %21 : i1 to i32
    %c0_i32_10 = arith.constant 0 : i32
    %23 = arith.cmpi ne, %22, %c0_i32_10 : i32
    scf.if %23 {
      %c0_17 = arith.constant 0 : index
      %c0_18 = arith.constant 0 : index
      %33 = vector.load %arg3[%c0_17, %c0_18] : memref<32x256xf32, #tpu.memory_space<vmem>>, vector<32x256xf32>
      %cst = arith.constant dense<0.000000e+00> : vector<8x256xf32>
      %34 = tpu.matmul %20, %33, %cst {dimension_numbers = #tpu.dot_dimension_numbers<[1], [0], [0], [1], [0, 0, 1, 1], [], []>} : vector<8x32xf32>, vector<32x256xf32>, vector<8x256xf32> -> vector<8x256xf32>
      %cst_19 = arith.constant 1.000000e+00 : f32
      %35 = vector.broadcast %cst_19 : f32 to vector<1x8xf32>
      %c0_20 = arith.constant 0 : index
      %c0_21 = arith.constant 0 : index
      %36 = vector.load %arg13[%c0_20, %c0_21] : memref<2x256xf32, #tpu.memory_space<vmem>>, vector<1x256xf32>
      %cst_22 = arith.constant dense<0.000000e+00> : vector<1x256xf32>
      %37 = tpu.matmul %35, %34, %cst_22 {dimension_numbers = #tpu.dot_dimension_numbers<[1], [0], [0], [1], [0, 0, 1, 1], [], []>} : vector<1x8xf32>, vector<8x256xf32>, vector<1x256xf32> -> vector<1x256xf32>
      %38 = arith.addf %36, %37 : vector<1x256xf32>
      %c0_23 = arith.constant 0 : index
      %c0_24 = arith.constant 0 : index
      %39 = vector.load %arg13[%c0_23, %c0_24] : memref<2x256xf32, #tpu.memory_space<vmem>>, vector<1x256xf32>
      tpu.vector_store %arg13[%c0_23, %c0_24], %38 {strides = array<i32>} : memref<2x256xf32, #tpu.memory_space<vmem>>, vector<1x256xf32>,
      %c1 = arith.constant 1 : index
      %c0_25 = arith.constant 0 : index
      %40 = vector.load %arg13[%c1, %c0_25] : memref<2x256xf32, #tpu.memory_space<vmem>>, vector<1x256xf32>
      %41 = arith.mulf %34, %34 : vector<8x256xf32>
      %cst_26 = arith.constant dense<0.000000e+00> : vector<1x256xf32>
      %42 = tpu.matmul %35, %41, %cst_26 {dimension_numbers = #tpu.dot_dimension_numbers<[1], [0], [0], [1], [0, 0, 1, 1], [], []>} : vector<1x8xf32>, vector<8x256xf32>, vector<1x256xf32> -> vector<1x256xf32>
      %43 = arith.addf %40, %42 : vector<1x256xf32>
      %c1_27 = arith.constant 1 : index
      %c0_28 = arith.constant 0 : index
      %44 = vector.load %arg13[%c1_27, %c0_28] : memref<2x256xf32, #tpu.memory_space<vmem>>, vector<1x256xf32>
      tpu.vector_store %arg13[%c1_27, %c0_28], %43 {strides = array<i32>} : memref<2x256xf32, #tpu.memory_space<vmem>>, vector<1x256xf32>,
    } else {
    }
    %c1_i32_11 = arith.constant 1 : i32
    %24 = arith.cmpi eq, %arg0, %c1_i32_11 : i32
    %25 = arith.extui %24 : i1 to i32
    %c0_i32_12 = arith.constant 0 : i32
    %26 = arith.cmpi ne, %25, %c0_i32_12 : i32
    scf.if %26 {
      %c0_17 = arith.constant 0 : index
      %c0_18 = arith.constant 0 : index
      %33 = vector.load %arg3[%c0_17, %c0_18] : memref<32x256xf32, #tpu.memory_space<vmem>>, vector<32x256xf32>
      %cst = arith.constant dense<0.000000e+00> : vector<8x256xf32>
      %34 = tpu.matmul %20, %33, %cst {dimension_numbers = #tpu.dot_dimension_numbers<[1], [0], [0], [1], [0, 0, 1, 1], [], []>} : vector<8x32xf32>, vector<32x256xf32>, vector<8x256xf32> -> vector<8x256xf32>
      %c0_19 = arith.constant 0 : index
      %c0_20 = arith.constant 0 : index
      %35 = vector.load %arg13[%c0_19, %c0_20] : memref<2x256xf32, #tpu.memory_space<vmem>>, vector<1x256xf32>
      %c1 = arith.constant 1 : index
      %c0_21 = arith.constant 0 : index
      %36 = vector.load %arg13[%c1, %c0_21] : memref<2x256xf32, #tpu.memory_space<vmem>>, vector<1x256xf32>
      %37 = vector.broadcast %35 : vector<1x256xf32> to vector<8x256xf32>
      %38 = arith.mulf %34, %37 : vector<8x256xf32>
      %39 = vector.broadcast %36 : vector<1x256xf32> to vector<8x256xf32>
      %40 = arith.addf %38, %39 : vector<8x256xf32>
      %cst_22 = arith.constant 0.000000e+00 : f32
      %41 = vector.broadcast %cst_22 : f32 to vector<8x256xf32>
      %42 = arith.maximumf %40, %41 : vector<8x256xf32>
      %c0_23 = arith.constant 0 : index
      %c0_24 = arith.constant 0 : index
      %43 = vector.load %arg6[%c0_23, %c0_24] : memref<256x128xf32, #tpu.memory_space<vmem>>, vector<256x128xf32>
      %cst_25 = arith.constant dense<0.000000e+00> : vector<8x128xf32>
      %44 = tpu.matmul %42, %43, %cst_25 {dimension_numbers = #tpu.dot_dimension_numbers<[1], [0], [0], [1], [0, 0, 1, 1], [], []>} : vector<8x256xf32>, vector<256x128xf32>, vector<8x128xf32> -> vector<8x128xf32>
      %cst_26 = arith.constant 1.000000e+00 : f32
      %45 = vector.broadcast %cst_26 : f32 to vector<1x8xf32>
      %c0_27 = arith.constant 0 : index
      %c0_28 = arith.constant 0 : index
      %46 = vector.load %arg14[%c0_27, %c0_28] : memref<2x128xf32, #tpu.memory_space<vmem>>, vector<1x128xf32>
      %cst_29 = arith.constant dense<0.000000e+00> : vector<1x128xf32>
      %47 = tpu.matmul %45, %44, %cst_29 {dimension_numbers = #tpu.dot_dimension_numbers<[1], [0], [0], [1], [0, 0, 1, 1], [], []>} : vector<1x8xf32>, vector<8x128xf32>, vector<1x128xf32> -> vector<1x128xf32>
      %48 = arith.addf %46, %47 : vector<1x128xf32>
      %c0_30 = arith.constant 0 : index
      %c0_31 = arith.constant 0 : index
      %49 = vector.load %arg14[%c0_30, %c0_31] : memref<2x128xf32, #tpu.memory_space<vmem>>, vector<1x128xf32>
      tpu.vector_store %arg14[%c0_30, %c0_31], %48 {strides = array<i32>} : memref<2x128xf32, #tpu.memory_space<vmem>>, vector<1x128xf32>,
      %c1_32 = arith.constant 1 : index
      %c0_33 = arith.constant 0 : index
      %50 = vector.load %arg14[%c1_32, %c0_33] : memref<2x128xf32, #tpu.memory_space<vmem>>, vector<1x128xf32>
      %51 = arith.mulf %44, %44 : vector<8x128xf32>
      %cst_34 = arith.constant dense<0.000000e+00> : vector<1x128xf32>
      %52 = tpu.matmul %45, %51, %cst_34 {dimension_numbers = #tpu.dot_dimension_numbers<[1], [0], [0], [1], [0, 0, 1, 1], [], []>} : vector<1x8xf32>, vector<8x128xf32>, vector<1x128xf32> -> vector<1x128xf32>
      %53 = arith.addf %50, %52 : vector<1x128xf32>
      %c1_35 = arith.constant 1 : index
      %c0_36 = arith.constant 0 : index
      %54 = vector.load %arg14[%c1_35, %c0_36] : memref<2x128xf32, #tpu.memory_space<vmem>>, vector<1x128xf32>
      tpu.vector_store %arg14[%c1_35, %c0_36], %53 {strides = array<i32>} : memref<2x128xf32, #tpu.memory_space<vmem>>, vector<1x128xf32>,
    } else {
    }
    %c2_i32_13 = arith.constant 2 : i32
    %27 = arith.cmpi eq, %arg0, %c2_i32_13 : i32
    %28 = arith.extui %27 : i1 to i32
    %c0_i32_14 = arith.constant 0 : i32
    %29 = arith.cmpi ne, %28, %c0_i32_14 : i32
    scf.if %29 {
      %c0_17 = arith.constant 0 : index
      %c0_18 = arith.constant 0 : index
      %33 = vector.load %arg3[%c0_17, %c0_18] : memref<32x256xf32, #tpu.memory_space<vmem>>, vector<32x256xf32>
      %cst = arith.constant dense<0.000000e+00> : vector<8x256xf32>
      %34 = tpu.matmul %20, %33, %cst {dimension_numbers = #tpu.dot_dimension_numbers<[1], [0], [0], [1], [0, 0, 1, 1], [], []>} : vector<8x32xf32>, vector<32x256xf32>, vector<8x256xf32> -> vector<8x256xf32>
      %c0_19 = arith.constant 0 : index
      %c0_20 = arith.constant 0 : index
      %35 = vector.load %arg13[%c0_19, %c0_20] : memref<2x256xf32, #tpu.memory_space<vmem>>, vector<1x256xf32>
      %c1 = arith.constant 1 : index
      %c0_21 = arith.constant 0 : index
      %36 = vector.load %arg13[%c1, %c0_21] : memref<2x256xf32, #tpu.memory_space<vmem>>, vector<1x256xf32>
      %37 = vector.broadcast %35 : vector<1x256xf32> to vector<8x256xf32>
      %38 = arith.mulf %34, %37 : vector<8x256xf32>
      %39 = vector.broadcast %36 : vector<1x256xf32> to vector<8x256xf32>
      %40 = arith.addf %38, %39 : vector<8x256xf32>
      %cst_22 = arith.constant 0.000000e+00 : f32
      %41 = vector.broadcast %cst_22 : f32 to vector<8x256xf32>
      %42 = arith.maximumf %40, %41 : vector<8x256xf32>
      %c0_23 = arith.constant 0 : index
      %c0_24 = arith.constant 0 : index
      %43 = vector.load %arg6[%c0_23, %c0_24] : memref<256x128xf32, #tpu.memory_space<vmem>>, vector<256x128xf32>
      %cst_25 = arith.constant dense<0.000000e+00> : vector<8x128xf32>
      %44 = tpu.matmul %42, %43, %cst_25 {dimension_numbers = #tpu.dot_dimension_numbers<[1], [0], [0], [1], [0, 0, 1, 1], [], []>} : vector<8x256xf32>, vector<256x128xf32>, vector<8x128xf32> -> vector<8x128xf32>
      %c0_26 = arith.constant 0 : index
      %c0_27 = arith.constant 0 : index
      %45 = vector.load %arg14[%c0_26, %c0_27] : memref<2x128xf32, #tpu.memory_space<vmem>>, vector<1x128xf32>
      %c1_28 = arith.constant 1 : index
      %c0_29 = arith.constant 0 : index
      %46 = vector.load %arg14[%c1_28, %c0_29] : memref<2x128xf32, #tpu.memory_space<vmem>>, vector<1x128xf32>
      %47 = vector.broadcast %45 : vector<1x128xf32> to vector<8x128xf32>
      %48 = arith.mulf %44, %47 : vector<8x128xf32>
      %49 = vector.broadcast %46 : vector<1x128xf32> to vector<8x128xf32>
      %50 = arith.addf %48, %49 : vector<8x128xf32>
      %cst_30 = arith.constant 0.000000e+00 : f32
      %51 = vector.broadcast %cst_30 : f32 to vector<8x128xf32>
      %52 = arith.maximumf %50, %51 : vector<8x128xf32>
      %c0_31 = arith.constant 0 : index
      %c0_32 = arith.constant 0 : index
      %53 = vector.load %arg9[%c0_31, %c0_32] : memref<128x128xf32, #tpu.memory_space<vmem>>, vector<128x128xf32>
      %cst_33 = arith.constant dense<0.000000e+00> : vector<8x128xf32>
      %54 = tpu.matmul %52, %53, %cst_33 {dimension_numbers = #tpu.dot_dimension_numbers<[1], [0], [0], [1], [0, 0, 1, 1], [], []>} : vector<8x128xf32>, vector<128x128xf32>, vector<8x128xf32> -> vector<8x128xf32>
      %cst_34 = arith.constant 1.000000e+00 : f32
      %55 = vector.broadcast %cst_34 : f32 to vector<1x8xf32>
      %c0_35 = arith.constant 0 : index
      %c0_36 = arith.constant 0 : index
      %56 = vector.load %arg15[%c0_35, %c0_36] : memref<2x128xf32, #tpu.memory_space<vmem>>, vector<1x128xf32>
      %cst_37 = arith.constant dense<0.000000e+00> : vector<1x128xf32>
      %57 = tpu.matmul %55, %54, %cst_37 {dimension_numbers = #tpu.dot_dimension_numbers<[1], [0], [0], [1], [0, 0, 1, 1], [], []>} : vector<1x8xf32>, vector<8x128xf32>, vector<1x128xf32> -> vector<1x128xf32>
      %58 = arith.addf %56, %57 : vector<1x128xf32>
      %c0_38 = arith.constant 0 : index
      %c0_39 = arith.constant 0 : index
      %59 = vector.load %arg15[%c0_38, %c0_39] : memref<2x128xf32, #tpu.memory_space<vmem>>, vector<1x128xf32>
      tpu.vector_store %arg15[%c0_38, %c0_39], %58 {strides = array<i32>} : memref<2x128xf32, #tpu.memory_space<vmem>>, vector<1x128xf32>,
      %c1_40 = arith.constant 1 : index
      %c0_41 = arith.constant 0 : index
      %60 = vector.load %arg15[%c1_40, %c0_41] : memref<2x128xf32, #tpu.memory_space<vmem>>, vector<1x128xf32>
      %61 = arith.mulf %54, %54 : vector<8x128xf32>
      %cst_42 = arith.constant dense<0.000000e+00> : vector<1x128xf32>
      %62 = tpu.matmul %55, %61, %cst_42 {dimension_numbers = #tpu.dot_dimension_numbers<[1], [0], [0], [1], [0, 0, 1, 1], [], []>} : vector<1x8xf32>, vector<8x128xf32>, vector<1x128xf32> -> vector<1x128xf32>
      %63 = arith.addf %60, %62 : vector<1x128xf32>
      %c1_43 = arith.constant 1 : index
      %c0_44 = arith.constant 0 : index
      %64 = vector.load %arg15[%c1_43, %c0_44] : memref<2x128xf32, #tpu.memory_space<vmem>>, vector<1x128xf32>
      tpu.vector_store %arg15[%c1_43, %c0_44], %63 {strides = array<i32>} : memref<2x128xf32, #tpu.memory_space<vmem>>, vector<1x128xf32>,
    } else {
    }
    %c3_i32_15 = arith.constant 3 : i32
    %30 = arith.cmpi eq, %arg0, %c3_i32_15 : i32
    %31 = arith.extui %30 : i1 to i32
    %c0_i32_16 = arith.constant 0 : i32
    %32 = arith.cmpi ne, %31, %c0_i32_16 : i32
    scf.if %32 {
      %c0_17 = arith.constant 0 : index
      %c0_18 = arith.constant 0 : index
      %33 = vector.load %arg3[%c0_17, %c0_18] : memref<32x256xf32, #tpu.memory_space<vmem>>, vector<32x256xf32>
      %cst = arith.constant dense<0.000000e+00> : vector<8x256xf32>
      %34 = tpu.matmul %20, %33, %cst {dimension_numbers = #tpu.dot_dimension_numbers<[1], [0], [0], [1], [0, 0, 1, 1], [], []>} : vector<8x32xf32>, vector<32x256xf32>, vector<8x256xf32> -> vector<8x256xf32>
      %c0_19 = arith.constant 0 : index
      %c0_20 = arith.constant 0 : index
      %35 = vector.load %arg13[%c0_19, %c0_20] : memref<2x256xf32, #tpu.memory_space<vmem>>, vector<1x256xf32>
      %c1 = arith.constant 1 : index
      %c0_21 = arith.constant 0 : index
      %36 = vector.load %arg13[%c1, %c0_21] : memref<2x256xf32, #tpu.memory_space<vmem>>, vector<1x256xf32>
      %37 = vector.broadcast %35 : vector<1x256xf32> to vector<8x256xf32>
      %38 = arith.mulf %34, %37 : vector<8x256xf32>
      %39 = vector.broadcast %36 : vector<1x256xf32> to vector<8x256xf32>
      %40 = arith.addf %38, %39 : vector<8x256xf32>
      %cst_22 = arith.constant 0.000000e+00 : f32
      %41 = vector.broadcast %cst_22 : f32 to vector<8x256xf32>
      %42 = arith.maximumf %40, %41 : vector<8x256xf32>
      %c0_23 = arith.constant 0 : index
      %c0_24 = arith.constant 0 : index
      %43 = vector.load %arg6[%c0_23, %c0_24] : memref<256x128xf32, #tpu.memory_space<vmem>>, vector<256x128xf32>
      %cst_25 = arith.constant dense<0.000000e+00> : vector<8x128xf32>
      %44 = tpu.matmul %42, %43, %cst_25 {dimension_numbers = #tpu.dot_dimension_numbers<[1], [0], [0], [1], [0, 0, 1, 1], [], []>} : vector<8x256xf32>, vector<256x128xf32>, vector<8x128xf32> -> vector<8x128xf32>
      %c0_26 = arith.constant 0 : index
      %c0_27 = arith.constant 0 : index
      %45 = vector.load %arg14[%c0_26, %c0_27] : memref<2x128xf32, #tpu.memory_space<vmem>>, vector<1x128xf32>
      %c1_28 = arith.constant 1 : index
      %c0_29 = arith.constant 0 : index
      %46 = vector.load %arg14[%c1_28, %c0_29] : memref<2x128xf32, #tpu.memory_space<vmem>>, vector<1x128xf32>
      %47 = vector.broadcast %45 : vector<1x128xf32> to vector<8x128xf32>
      %48 = arith.mulf %44, %47 : vector<8x128xf32>
      %49 = vector.broadcast %46 : vector<1x128xf32> to vector<8x128xf32>
      %50 = arith.addf %48, %49 : vector<8x128xf32>
      %cst_30 = arith.constant 0.000000e+00 : f32
      %51 = vector.broadcast %cst_30 : f32 to vector<8x128xf32>
      %52 = arith.maximumf %50, %51 : vector<8x128xf32>
      %c0_31 = arith.constant 0 : index
      %c0_32 = arith.constant 0 : index
      %53 = vector.load %arg9[%c0_31, %c0_32] : memref<128x128xf32, #tpu.memory_space<vmem>>, vector<128x128xf32>
      %cst_33 = arith.constant dense<0.000000e+00> : vector<8x128xf32>
      %54 = tpu.matmul %52, %53, %cst_33 {dimension_numbers = #tpu.dot_dimension_numbers<[1], [0], [0], [1], [0, 0, 1, 1], [], []>} : vector<8x128xf32>, vector<128x128xf32>, vector<8x128xf32> -> vector<8x128xf32>
      %c0_34 = arith.constant 0 : index
      %c0_35 = arith.constant 0 : index
      %55 = vector.load %arg15[%c0_34, %c0_35] : memref<2x128xf32, #tpu.memory_space<vmem>>, vector<1x128xf32>
      %c1_36 = arith.constant 1 : index
      %c0_37 = arith.constant 0 : index
      %56 = vector.load %arg15[%c1_36, %c0_37] : memref<2x128xf32, #tpu.memory_space<vmem>>, vector<1x128xf32>
      %57 = vector.broadcast %55 : vector<1x128xf32> to vector<8x128xf32>
      %58 = arith.mulf %54, %57 : vector<8x128xf32>
      %59 = vector.broadcast %56 : vector<1x128xf32> to vector<8x128xf32>
      %60 = arith.addf %58, %59 : vector<8x128xf32>
      %cst_38 = arith.constant 0.000000e+00 : f32
      %61 = vector.broadcast %cst_38 : f32 to vector<8x128xf32>
      %62 = arith.maximumf %60, %61 : vector<8x128xf32>
      %c0_39 = arith.constant 0 : index
      %c0_40 = arith.constant 0 : index
      %63 = vector.load %arg12[%c0_39, %c0_40] : memref<8x128xf32, #tpu.memory_space<vmem>>, vector<8x128xf32>
      tpu.vector_store %arg12[%c0_39, %c0_40], %62 {strides = array<i32>} : memref<8x128xf32, #tpu.memory_space<vmem>>, vector<8x128xf32>,
    } else {
    }
    return
  }
  func.func @transform_0(%arg0: i32, %arg1: i32) -> (i32, i32) {
    %c0_i32 = arith.constant 0 : i32
    %c0_i32_0 = arith.constant 0 : i32
    return %arg1, %c0_i32 : i32, i32
  }
  func.func @transform_1(%arg0: i32, %arg1: i32) -> (i32, i32) {
    %c0_i32 = arith.constant 0 : i32
    %c0_i32_0 = arith.constant 0 : i32
    %c0_i32_1 = arith.constant 0 : i32
    return %c0_i32, %c0_i32_0 : i32, i32
  }
  func.func @transform_2(%arg0: i32, %arg1: i32) -> (i32, i32) {
    %c0_i32 = arith.constant 0 : i32
    %c0_i32_0 = arith.constant 0 : i32
    %c0_i32_1 = arith.constant 0 : i32
    return %c0_i32, %c0_i32_0 : i32, i32
  }
  func.func @transform_3(%arg0: i32, %arg1: i32) -> (i32, i32) {
    %c0_i32 = arith.constant 0 : i32
    %c0_i32_0 = arith.constant 0 : i32
    %c0_i32_1 = arith.constant 0 : i32
    return %c0_i32, %c0_i32_0 : i32, i32
  }
  func.func @transform_4(%arg0: i32, %arg1: i32) -> (i32, i32) {
    %c0_i32 = arith.constant 0 : i32
    %c0_i32_0 = arith.constant 0 : i32
    %c0_i32_1 = arith.constant 0 : i32
    return %c0_i32, %c0_i32_0 : i32, i32
  }
  func.func @transform_5(%arg0: i32, %arg1: i32) -> (i32, i32) {
    %c0_i32 = arith.constant 0 : i32
    %c0_i32_0 = arith.constant 0 : i32
    %c0_i32_1 = arith.constant 0 : i32
    return %c0_i32, %c0_i32_0 : i32, i32
  }
  func.func @transform_6(%arg0: i32, %arg1: i32) -> (i32, i32) {
    %c0_i32 = arith.constant 0 : i32
    %c0_i32_0 = arith.constant 0 : i32
    %c0_i32_1 = arith.constant 0 : i32
    return %c0_i32, %c0_i32_0 : i32, i32
  }
  func.func @transform_7(%arg0: i32, %arg1: i32) -> (i32, i32) {
    %c0_i32 = arith.constant 0 : i32
    %c0_i32_0 = arith.constant 0 : i32
    %c0_i32_1 = arith.constant 0 : i32
    return %c0_i32, %c0_i32_0 : i32, i32
  }
  func.func @transform_8(%arg0: i32, %arg1: i32) -> (i32, i32) {
    %c0_i32 = arith.constant 0 : i32
    %c0_i32_0 = arith.constant 0 : i32
    %c0_i32_1 = arith.constant 0 : i32
    return %c0_i32, %c0_i32_0 : i32, i32
  }
  func.func @transform_9(%arg0: i32, %arg1: i32) -> (i32, i32) {
    %c0_i32 = arith.constant 0 : i32
    %c0_i32_0 = arith.constant 0 : i32
    %c0_i32_1 = arith.constant 0 : i32
    return %c0_i32, %c0_i32_0 : i32, i32
  }
  func.func @transform_10(%arg0: i32, %arg1: i32) -> (i32, i32) {
    %c3_i32 = arith.constant 3 : i32
    %0 = arith.cmpi eq, %arg0, %c3_i32 : i32
    %c0_i32 = arith.constant 0 : i32
    %1 = arith.select %0, %arg1, %c0_i32 : i32
    %c0_i32_0 = arith.constant 0 : i32
    %c0_i32_1 = arith.constant 0 : i32
    return %1, %c0_i32_0 : i32, i32
  }
}

</mosaic_0001>

<llo_original>
// kernel: tpu_custom_call.1
$region0: #{tpu_custom_call.1}
  #allocation0 [shape = 'u32[]', space=smem, size = 0x4, offset = 0x4, fixed_abs, tag = 'smem constant byte address 0x4 - core index']
  #allocation1 [shape = 'u32[144,128]{1,0:T(1,128)}', space=vmem, size = 0x12000, scoped, tag = 'internal scratch']
  #allocation2 [shape = 'f32[2,256]{1,0:T(2,128)}', space=vmem, size = 0x800, scoped, tag = 'scratch operand']
  #allocation3 [shape = 'f32[2,128]{1,0:T(2,128)}', space=vmem, size = 0x400, scoped, tag = 'scratch operand']
  #allocation4 [shape = 'f32[2,128]{1,0:T(2,128)}', space=vmem, size = 0x400, scoped, tag = 'scratch operand']
  %s0 = inlined_call_operand.hbm [shape: f32[8,32], index: 0, kind: input, shape index: {}]
  %s1 = inlined_call_operand.hbm [shape: f32[32,256], index: 1, kind: input, shape index: {}]
  %s2 = inlined_call_operand.vmem [shape: f32[1,256], index: 2, kind: input, shape index: {}]
  %s3 = inlined_call_operand.vmem [shape: f32[1,256], index: 3, kind: input, shape index: {}]
  %s4 = inlined_call_operand.hbm [shape: f32[256,128], index: 4, kind: input, shape index: {}]
  %s5 = inlined_call_operand.vmem [shape: f32[1,128], index: 5, kind: input, shape index: {}]
  %s6 = inlined_call_operand.vmem [shape: f32[1,128], index: 6, kind: input, shape index: {}]
  %s7 = inlined_call_operand.hbm [shape: f32[128,128], index: 7, kind: input, shape index: {}]
  %s8 = inlined_call_operand.vmem [shape: f32[1,128], index: 8, kind: input, shape index: {}]
  %s9 = inlined_call_operand.vmem [shape: f32[1,128], index: 9, kind: input, shape index: {}]
  %s10 = inlined_call_operand.hbm [shape: f32[8,128], index: 10, kind: output, shape index: {}]
  %s11 = sld [smem:[#allocation0]]
  $region121: #{tpu_custom_call.1} parent=0
    _
  %s13 = ssub.s32 1, %s11
  %s14 = scalar_select 0, %s13, %s11
  $region1: #{tpu_custom_call.1} parent=0
    #allocation5 [shape = 'u8[4096]{0}', space=vmem, size = 0x1000, scoped, tag = 'input window, operand 0, single buffered']
    #allocation6 [shape = 's32[2]{0}', space=sflag, size = 0x8, scoped, tag = 'scoped memory for tpu_custom_call.1']
    #allocation7 [shape = 's32[2]{0}', space=sflag, size = 0x8, scoped, tag = 'scoped memory for tpu_custom_call.1']
    #allocation8 [shape = 'u8[32768]{0}', space=vmem, size = 0x8000, scoped, tag = 'input window, operand 1, single buffered']
    #allocation9 [shape = 's32[1]{0}', space=sflag, size = 0x4, scoped, tag = 'scoped memory for tpu_custom_call.1']
    #allocation10 [shape = 'u8[131072]{0}', space=vmem, size = 0x20000, scoped, tag = 'input window, operand 4, single buffered']
    #allocation11 [shape = 'u8[65536]{0}', space=vmem, size = 0x10000, scoped, tag = 'input window, operand 7, single buffered']
    #allocation12 [shape = 's32[1]{0}', space=sflag, size = 0x4, scoped, tag = 'scoped memory for tpu_custom_call.1']
    #allocation13 [shape = 'u8[8192]{0}', space=vmem, size = 0x2000, scoped, tag = 'output window, operand 0']
    %15 = vsyncpa [#allocation6], 0
    %16 = vsyncpa [#allocation9], 0
    %17 = vsyncpa [#allocation12], 0
    %18 = vsyncpa [#allocation7], 0
    %s19 = scalar_lea.sflag [#allocation7], 1
    %20 = vsyncpa %s19, 0
    loop: start=0, step=1, limit=6
    $region2: #{tpu_custom_call.1} parent=1 // loop_pre_header
      _
    $region3: #{tpu_custom_call.1} parent=1 // loop_header
      %s22 = sphi 0, %s26
      %p23 = scmp.ge.s32.totalorder %s22, 6
      %s29 = sphi 0, %s41
      %s30 = sphi 0, %s37
      %s31 = sphi 0, %s29
      %s32 = sphi 0, %s30
      %s33 = sphi 0, %s31
      %s34 = sphi 0, %s32
      %s44 = sphi 0, %s46
      %s47 = sphi 0, %s44
      %s48 = sphi 0, %s47
      %s64 = sphi 0, %s48
      %s68 = sphi 0, %s68
      %s70 = sphi 0, %s68
      %s71 = sphi 0, %s70
      %s85 = sphi 0, %s71
      %s89 = sphi 0, %s89
      %s91 = sphi 0, %s89
      %s92 = sphi 0, %s91
      %s106 = sphi 0, %s92
      %s110 = sphi 0, %s110
      %s112 = sphi 0, %s110
      %s113 = sphi 0, %s112
      %s127 = sphi 0, %s113
      %s131 = sphi 0, %s131
      %s133 = sphi 0, %s131
      %s134 = sphi 0, %s133
      %s148 = sphi 0, %s134
      %s152 = sphi 0, %s152
      %s154 = sphi 0, %s152
      %s155 = sphi 0, %s154
      %s169 = sphi 0, %s155
      %s173 = sphi 0, %s173
      %s175 = sphi 0, %s173
      %s176 = sphi 0, %s175
      %s190 = sphi 0, %s176
      %s194 = sphi 0, %s194
      %s196 = sphi 0, %s194
      %s197 = sphi 0, %s196
      %s211 = sphi 0, %s197
      %s215 = sphi 0, %s215
      %s217 = sphi 0, %s215
      %s218 = sphi 0, %s217
      %s232 = sphi 0, %s218
      %s236 = sphi 0, %s236
      %s238 = sphi 0, %s236
      %s239 = sphi 0, %s238
      %s253 = sphi 0, %s239
      %s263 = sphi 0, %s265
      %s266 = sphi 0, %s263
      %s267 = sphi 0, %s266
      %s283 = sphi 0, %s267
    $region4: #{tpu_custom_call.1} parent=1 // loop_header_branch
      %25 = sbr.rel (%p23) target = $region8
    $region5: #{tpu_custom_call.1} parent=1 // loop_body
      %s27 = ssub.s32 %s22, 1
      %s28 = ssub.s32 %s22, 2
      %s35 = sadd.s32 1, %s30
      %p36 = scmp.ge.s32.totalorder %s35, 1
      %s37 = scalar_select %p36, 0, %s35
      %s38 = sadd.s32 1, %s29
      %s39 = scalar_select %p36, %s38, %s29
      %p40 = scmp.ge.s32.totalorder %s39, 4
      %s41 = scalar_select %p40, 0, %s39
      %s42 = ssub.s32 %s30, %s37
      %p43 = scmp.eq.s32.totalorder %s42, 0
      %s45 = sadd.s32 %s44, 1
      %s46 = scalar_select %p43, %s44, %s45
      %p49 = pneg %p43
      %p50 = scmp.eq.s32.totalorder %s22, 3
      %p51 = por %p49, %p50
      %p52 = scmp.ne.s32.totalorder %s44, %s47
      %p53 = scmp.eq.s32.totalorder %s22, 0
      %p54 = por %p52, %p53
      %p55 = scmp.ne.s32.totalorder %s44, %s47
      %p56 = scmp.eq.s32.totalorder %s27, 3
      %p57 = por %p55, %p56
      %p58 = scmp.ne.s32.totalorder %s47, %s48
      %p59 = scmp.eq.s32.totalorder %s27, 0
      %p60 = por %p58, %p59
      %p61 = scmp.ne.s32.totalorder %s47, %s48
      %p62 = scmp.eq.s32.totalorder %s28, 3
      %p63 = por %p61, %p62
      %p65 = scmp.ne.s32.totalorder %s48, %s64
      %p66 = scmp.eq.s32.totalorder %s28, 0
      %p67 = por %p65, %p66
      %s69 = sadd.s32 %s68, 1
      %p72 = scmp.eq.s32.totalorder %s22, 3
      %p73 = scmp.ne.s32.totalorder %s68, %s70
      %p74 = scmp.eq.s32.totalorder %s22, 0
      %p75 = por %p73, %p74
      %p76 = scmp.ne.s32.totalorder %s68, %s70
      %p77 = scmp.eq.s32.totalorder %s27, 3
      %p78 = por %p76, %p77
      %p79 = scmp.ne.s32.totalorder %s70, %s71
      %p80 = scmp.eq.s32.totalorder %s27, 0
      %p81 = por %p79, %p80
      %p82 = scmp.ne.s32.totalorder %s70, %s71
      %p83 = scmp.eq.s32.totalorder %s28, 3
      %p84 = por %p82, %p83
      %p86 = scmp.ne.s32.totalorder %s71, %s85
      %p87 = scmp.eq.s32.totalorder %s28, 0
      %p88 = por %p86, %p87
      %s90 = sadd.s32 %s89, 1
      %p93 = scmp.eq.s32.totalorder %s22, 3
      %p94 = scmp.ne.s32.totalorder %s89, %s91
      %p95 = scmp.eq.s32.totalorder %s22, 0
      %p96 = por %p94, %p95
      %p97 = scmp.ne.s32.totalorder %s89, %s91
      %p98 = scmp.eq.s32.totalorder %s27, 3
      %p99 = por %p97, %p98
      %p100 = scmp.ne.s32.totalorder %s91, %s92
      %p101 = scmp.eq.s32.totalorder %s27, 0
      %p102 = por %p100, %p101
      %p103 = scmp.ne.s32.totalorder %s91, %s92
      %p104 = scmp.eq.s32.totalorder %s28, 3
      %p105 = por %p103, %p104
      %p107 = scmp.ne.s32.totalorder %s92, %s106
      %p108 = scmp.eq.s32.totalorder %s28, 0
      %p109 = por %p107, %p108
      %s111 = sadd.s32 %s110, 1
      %p114 = scmp.eq.s32.totalorder %s22, 3
      %p115 = scmp.ne.s32.totalorder %s110, %s112
      %p116 = scmp.eq.s32.totalorder %s22, 0
      %p117 = por %p115, %p116
      %p118 = scmp.ne.s32.totalorder %s110, %s112
      %p119 = scmp.eq.s32.totalorder %s27, 3
      %p120 = por %p118, %p119
      %p121 = scmp.ne.s32.totalorder %s112, %s113
      %p122 = scmp.eq.s32.totalorder %s27, 0
      %p123 = por %p121, %p122
      %p124 = scmp.ne.s32.totalorder %s112, %s113
      %p125 = scmp.eq.s32.totalorder %s28, 3
      %p126 = por %p124, %p125
      %p128 = scmp.ne.s32.totalorder %s113, %s127
      %p129 = scmp.eq.s32.totalorder %s28, 0
      %p130 = por %p128, %p129
      %s132 = sadd.s32 %s131, 1
      %p135 = scmp.eq.s32.totalorder %s22, 3
      %p136 = scmp.ne.s32.totalorder %s131, %s133
      %p137 = scmp.eq.s32.totalorder %s22, 0
      %p138 = por %p136, %p137
      %p139 = scmp.ne.s32.totalorder %s131, %s133
      %p140 = scmp.eq.s32.totalorder %s27, 3
      %p141 = por %p139, %p140
      %p142 = scmp.ne.s32.totalorder %s133, %s134
      %p143 = scmp.eq.s32.totalorder %s27, 0
      %p144 = por %p142, %p143
      %p145 = scmp.ne.s32.totalorder %s133, %s134
      %p146 = scmp.eq.s32.totalorder %s28, 3
      %p147 = por %p145, %p146
      %p149 = scmp.ne.s32.totalorder %s134, %s148
      %p150 = scmp.eq.s32.totalorder %s28, 0
      %p151 = por %p149, %p150
      %s153 = sadd.s32 %s152, 1
      %p156 = scmp.eq.s32.totalorder %s22, 3
      %p157 = scmp.ne.s32.totalorder %s152, %s154
      %p158 = scmp.eq.s32.totalorder %s22, 0
      %p159 = por %p157, %p158
      %p160 = scmp.ne.s32.totalorder %s152, %s154
      %p161 = scmp.eq.s32.totalorder %s27, 3
      %p162 = por %p160, %p161
      %p163 = scmp.ne.s32.totalorder %s154, %s155
      %p164 = scmp.eq.s32.totalorder %s27, 0
      %p165 = por %p163, %p164
      %p166 = scmp.ne.s32.totalorder %s154, %s155
      %p167 = scmp.eq.s32.totalorder %s28, 3
      %p168 = por %p166, %p167
      %p170 = scmp.ne.s32.totalorder %s155, %s169
      %p171 = scmp.eq.s32.totalorder %s28, 0
      %p172 = por %p170, %p171
      %s174 = sadd.s32 %s173, 1
      %p177 = scmp.eq.s32.totalorder %s22, 3
      %p178 = scmp.ne.s32.totalorder %s173, %s175
      %p179 = scmp.eq.s32.totalorder %s22, 0
      %p180 = por %p178, %p179
      %p181 = scmp.ne.s32.totalorder %s173, %s175
      %p182 = scmp.eq.s32.totalorder %s27, 3
      %p183 = por %p181, %p182
      %p184 = scmp.ne.s32.totalorder %s175, %s176
      %p185 = scmp.eq.s32.totalorder %s27, 0
      %p186 = por %p184, %p185
      %p187 = scmp.ne.s32.totalorder %s175, %s176
      %p188 = scmp.eq.s32.totalorder %s28, 3
      %p189 = por %p187, %p188
      %p191 = scmp.ne.s32.totalorder %s176, %s190
      %p192 = scmp.eq.s32.totalorder %s28, 0
      %p193 = por %p191, %p192
      %s195 = sadd.s32 %s194, 1
      %p198 = scmp.eq.s32.totalorder %s22, 3
      %p199 = scmp.ne.s32.totalorder %s194, %s196
      %p200 = scmp.eq.s32.totalorder %s22, 0
      %p201 = por %p199, %p200
      %p202 = scmp.ne.s32.totalorder %s194, %s196
      %p203 = scmp.eq.s32.totalorder %s27, 3
      %p204 = por %p202, %p203
      %p205 = scmp.ne.s32.totalorder %s196, %s197
      %p206 = scmp.eq.s32.totalorder %s27, 0
      %p207 = por %p205, %p206
      %p208 = scmp.ne.s32.totalorder %s196, %s197
      %p209 = scmp.eq.s32.totalorder %s28, 3
      %p210 = por %p208, %p209
      %p212 = scmp.ne.s32.totalorder %s197, %s211
      %p213 = scmp.eq.s32.totalorder %s28, 0
      %p214 = por %p212, %p213
      %s216 = sadd.s32 %s215, 1
      %p219 = scmp.eq.s32.totalorder %s22, 3
      %p220 = scmp.ne.s32.totalorder %s215, %s217
      %p221 = scmp.eq.s32.totalorder %s22, 0
      %p222 = por %p220, %p221
      %p223 = scmp.ne.s32.totalorder %s215, %s217
      %p224 = scmp.eq.s32.totalorder %s27, 3
      %p225 = por %p223, %p224
      %p226 = scmp.ne.s32.totalorder %s217, %s218
      %p227 = scmp.eq.s32.totalorder %s27, 0
      %p228 = por %p226, %p227
      %p229 = scmp.ne.s32.totalorder %s217, %s218
      %p230 = scmp.eq.s32.totalorder %s28, 3
      %p231 = por %p229, %p230
      %p233 = scmp.ne.s32.totalorder %s218, %s232
      %p234 = scmp.eq.s32.totalorder %s28, 0
      %p235 = por %p233, %p234
      %s237 = sadd.s32 %s236, 1
      %p240 = scmp.eq.s32.totalorder %s22, 3
      %p241 = scmp.ne.s32.totalorder %s236, %s238
      %p242 = scmp.eq.s32.totalorder %s22, 0
      %p243 = por %p241, %p242
      %p244 = scmp.ne.s32.totalorder %s236, %s238
      %p245 = scmp.eq.s32.totalorder %s27, 3
      %p246 = por %p244, %p245
      %p247 = scmp.ne.s32.totalorder %s238, %s239
      %p248 = scmp.eq.s32.totalorder %s27, 0
      %p249 = por %p247, %p248
      %p250 = scmp.ne.s32.totalorder %s238, %s239
      %p251 = scmp.eq.s32.totalorder %s28, 3
      %p252 = por %p250, %p251
      %p254 = scmp.ne.s32.totalorder %s239, %s253
      %p255 = scmp.eq.s32.totalorder %s28, 0
      %p256 = por %p254, %p255
      %p257 = scmp.eq.s32.totalorder %s29, 3
      %s258 = scalar_select %p257, %s30, 0
      %p259 = scmp.eq.s32.totalorder %s41, 3
      %s260 = scalar_select %p259, %s37, 0
      %s261 = ssub.s32 %s258, %s260
      %p262 = scmp.eq.s32.totalorder %s261, 0
      %s264 = sadd.s32 %s263, 1
      %s265 = scalar_select %p262, %s263, %s264
      %p268 = pneg %p262
      %p269 = scmp.eq.s32.totalorder %s22, 3
      %p270 = por %p268, %p269
      %p271 = scmp.ne.s32.totalorder %s263, %s266
      %p272 = scmp.eq.s32.totalorder %s22, 0
      %p273 = por %p271, %p272
      %p274 = scmp.ne.s32.totalorder %s263, %s266
      %p275 = scmp.eq.s32.totalorder %s27, 3
      %p276 = por %p274, %p275
      %p277 = scmp.ne.s32.totalorder %s266, %s267
      %p278 = scmp.eq.s32.totalorder %s27, 0
      %p279 = por %p277, %p278
      %p280 = scmp.ne.s32.totalorder %s266, %s267
      %p281 = scmp.eq.s32.totalorder %s28, 3
      %p282 = por %p280, %p281
      %p284 = scmp.ne.s32.totalorder %s267, %s283
      %p285 = scmp.eq.s32.totalorder %s28, 0
      %p286 = por %p284, %p285
      %p287 = scmp.le.s32.totalorder 1, %s22
      %p288 = scmp.lt.s32.totalorder %s22, 5
      %p289 = pnand %p287, %p288
      %p290 = pneg %p289
      // Predicated region
      $region9: #{tpu_custom_call.1} parent=5 // pred_check
        _
      $region10: #{tpu_custom_call.1} parent=5 // pred_check_branch
        %292 = sbr.rel (%p289) target = $region12
      $region11: #{tpu_custom_call.1} parent=5 // pred_region
        %s293 = ssub.s32 %s22, 1
        // Predicated region
        $region13: #{tpu_custom_call.1} parent=11 // pred_check
          %p294 = pneg %p60
        $region14: #{tpu_custom_call.1} parent=11 // pred_check_branch
          %296 = sbr.rel (%p294) target = $region16
        $region15: #{tpu_custom_call.1} parent=11 // pred_region
          %s298 = ssub.s32 128, 128
          %299 = vsyncadd [#allocation6], %s298
          %s300 = smul.addr %s32, 128
          %s301 = scalar_lea.hbm %s0, %s300
          %s303 = sshll.u32 [#allocation5], 4
          %s304 = int_to_ptr.vmem [resolvable:$true] %s303
          %306 = dma.hbm_to_vmem [thread:$0]  %s301, 128, %s304, [#allocation6]
        $region16: #{tpu_custom_call.1} parent=11 // pred_fallthru
          _
        // Predicated region
        $region17: #{tpu_custom_call.1} parent=11 // pred_check
          %p307 = pneg %p81
        $region18: #{tpu_custom_call.1} parent=11 // pred_check_branch
          %309 = sbr.rel (%p307) target = $region20
        $region19: #{tpu_custom_call.1} parent=11 // pred_region
          %s311 = ssub.s32 1024, 1024
          %312 = vsyncadd [#allocation9], %s311
          %s313 = sshll.u32 [#allocation8], 4
          %s314 = int_to_ptr.vmem [resolvable:$true] %s313
          %319 = dma.hbm_to_vmem [thread:$0]  %s1, 1024, %s314, [#allocation9], 256, 256, 16
        $region20: #{tpu_custom_call.1} parent=11 // pred_fallthru
          _
        // Predicated region
        $region21: #{tpu_custom_call.1} parent=11 // pred_check
          %p320 = pneg %p102
        $region22: #{tpu_custom_call.1} parent=11 // pred_check_branch
          %322 = sbr.rel (%p320) target = $region24
        $region23: #{tpu_custom_call.1} parent=11 // pred_region
          _
        $region24: #{tpu_custom_call.1} parent=11 // pred_fallthru
          _
        // Predicated region
        $region25: #{tpu_custom_call.1} parent=11 // pred_check
          %p323 = pneg %p123
        $region26: #{tpu_custom_call.1} parent=11 // pred_check_branch
          %325 = sbr.rel (%p323) target = $region28
        $region27: #{tpu_custom_call.1} parent=11 // pred_region
          _
        $region28: #{tpu_custom_call.1} parent=11 // pred_fallthru
          _
        // Predicated region
        $region29: #{tpu_custom_call.1} parent=11 // pred_check
          %p326 = pneg %p144
        $region30: #{tpu_custom_call.1} parent=11 // pred_check_branch
          %328 = sbr.rel (%p326) target = $region32
        $region31: #{tpu_custom_call.1} parent=11 // pred_region
          %s330 = ssub.s32 4096, 4096
          %331 = vsyncadd [#allocation9], %s330
          %s332 = sshll.u32 [#allocation10], 4
          %s333 = int_to_ptr.vmem [resolvable:$true] %s332
          %338 = dma.hbm_to_vmem [thread:$0]  %s4, 4096, %s333, [#allocation9], 128, 128, 8
        $region32: #{tpu_custom_call.1} parent=11 // pred_fallthru
          _
        // Predicated region
        $region33: #{tpu_custom_call.1} parent=11 // pred_check
          %p339 = pneg %p165
        $region34: #{tpu_custom_call.1} parent=11 // pred_check_branch
          %341 = sbr.rel (%p339) target = $region36
        $region35: #{tpu_custom_call.1} parent=11 // pred_region
          _
        $region36: #{tpu_custom_call.1} parent=11 // pred_fallthru
          _
        // Predicated region
        $region37: #{tpu_custom_call.1} parent=11 // pred_check
          %p342 = pneg %p186
        $region38: #{tpu_custom_call.1} parent=11 // pred_check_branch
          %344 = sbr.rel (%p342) target = $region40
        $region39: #{tpu_custom_call.1} parent=11 // pred_region
          _
        $region40: #{tpu_custom_call.1} parent=11 // pred_fallthru
          _
        // Predicated region
        $region41: #{tpu_custom_call.1} parent=11 // pred_check
          %p345 = pneg %p207
        $region42: #{tpu_custom_call.1} parent=11 // pred_check_branch
          %347 = sbr.rel (%p345) target = $region44
        $region43: #{tpu_custom_call.1} parent=11 // pred_region
          %s349 = ssub.s32 2048, 2048
          %350 = vsyncadd [#allocation12], %s349
          %s351 = sshll.u32 [#allocation11], 4
          %s352 = int_to_ptr.vmem [resolvable:$true] %s351
          %357 = dma.hbm_to_vmem [thread:$0]  %s7, 2048, %s352, [#allocation12], 128, 128, 8
        $region44: #{tpu_custom_call.1} parent=11 // pred_fallthru
          _
        // Predicated region
        $region45: #{tpu_custom_call.1} parent=11 // pred_check
          %p358 = pneg %p228
        $region46: #{tpu_custom_call.1} parent=11 // pred_check_branch
          %360 = sbr.rel (%p358) target = $region48
        $region47: #{tpu_custom_call.1} parent=11 // pred_region
          _
        $region48: #{tpu_custom_call.1} parent=11 // pred_fallthru
          _
        // Predicated region
        $region49: #{tpu_custom_call.1} parent=11 // pred_check
          %p361 = pneg %p249
        $region50: #{tpu_custom_call.1} parent=11 // pred_check_branch
          %363 = sbr.rel (%p361) target = $region52
        $region51: #{tpu_custom_call.1} parent=11 // pred_region
          _
        $region52: #{tpu_custom_call.1} parent=11 // pred_fallthru
          _
      $region12: #{tpu_custom_call.1} parent=5 // pred_fallthru
        _
      %p364 = scmp.lt.s32.totalorder %s22, 4
      // Predicated region
      $region53: #{tpu_custom_call.1} parent=5 // pred_check
        %p365 = pneg %p364
      $region54: #{tpu_custom_call.1} parent=5 // pred_check_branch
        %367 = sbr.rel (%p365) target = $region56
      $region55: #{tpu_custom_call.1} parent=5 // pred_region
        _
      $region56: #{tpu_custom_call.1} parent=5 // pred_fallthru
        _
      %p368 = scmp.le.s32.totalorder 1, %s22
      %p369 = scmp.lt.s32.totalorder %s22, 5
      %p370 = pnand %p368, %p369
      %p371 = pneg %p370
      // Predicated region
      $region57: #{tpu_custom_call.1} parent=5 // pred_check
        _
      $region58: #{tpu_custom_call.1} parent=5 // pred_check_branch
        %373 = sbr.rel (%p370) target = $region60
      $region59: #{tpu_custom_call.1} parent=5 // pred_region
        %s374 = ssub.s32 %s22, 1
        // Predicated region
        $region61: #{tpu_custom_call.1} parent=59 // pred_check
          %p375 = pneg %p60
        $region62: #{tpu_custom_call.1} parent=59 // pred_check_branch
          %377 = sbr.rel (%p375) target = $region64
        $region63: #{tpu_custom_call.1} parent=59 // pred_region
          %378 = dma.done [#allocation6], 128
        $region64: #{tpu_custom_call.1} parent=59 // pred_fallthru
          _
        // Predicated region
        $region65: #{tpu_custom_call.1} parent=59 // pred_check
          %p379 = pneg %p81
        $region66: #{tpu_custom_call.1} parent=59 // pred_check_branch
          %381 = sbr.rel (%p379) target = $region68
        $region67: #{tpu_custom_call.1} parent=59 // pred_region
          %382 = dma.done [#allocation9], 1024
        $region68: #{tpu_custom_call.1} parent=59 // pred_fallthru
          _
        // Predicated region
        $region69: #{tpu_custom_call.1} parent=59 // pred_check
          %p383 = pneg %p144
        $region70: #{tpu_custom_call.1} parent=59 // pred_check_branch
          %385 = sbr.rel (%p383) target = $region72
        $region71: #{tpu_custom_call.1} parent=59 // pred_region
          %386 = dma.done [#allocation9], 4096
        $region72: #{tpu_custom_call.1} parent=59 // pred_fallthru
          _
        // Predicated region
        $region73: #{tpu_custom_call.1} parent=59 // pred_check
          %p387 = pneg %p207
        $region74: #{tpu_custom_call.1} parent=59 // pred_check_branch
          %389 = sbr.rel (%p387) target = $region76
        $region75: #{tpu_custom_call.1} parent=59 // pred_region
          %390 = dma.done [#allocation12], 2048
        $region76: #{tpu_custom_call.1} parent=59 // pred_fallthru
          _
        %p391 = pneg %p60
        %p392 = pneg %p57
        %p393 = pneg %p81
        %p394 = pneg %p78
        %p395 = pneg %p102
        %p396 = pneg %p99
        %p397 = pneg %p123
        %p398 = pneg %p120
        %p399 = pneg %p144
        %p400 = pneg %p141
        %p401 = pneg %p165
        %p402 = pneg %p162
        %p403 = pneg %p186
        %p404 = pneg %p183
        %p405 = pneg %p207
        %p406 = pneg %p204
        %p407 = pneg %p228
        %p408 = pneg %p225
        %p409 = pneg %p249
        %p410 = pneg %p246
        %p411 = pneg %p279
        %p412 = pneg %p276
        %s413 = sand.u32 %s266, 1
        %s414 = scalar_lea.sflag [#allocation7], %s413
        %s415 = sand.u32 %s266, 1
        %s416 = smul.addr %s415, 8
        %s417 = scalar_lea.vmem [#allocation13], %s416
        %p418 = scmp.eq.s32.totalorder %s31, 3
        %s419 = scalar_select %p418, %s32, 0
        %p420 = scmp.eq.s32.totalorder %s31, 0
        %p421 = scmp.eq.s32.totalorder %s32, 0
        %p422 = pnand %p420, %p421
        %p423 = pneg %p422
        // Predicated region
        $region77: #{tpu_custom_call.1} parent=59 // pred_check
          _
        $region78: #{tpu_custom_call.1} parent=59 // pred_check_branch
          %425 = sbr.rel (%p422) target = $region80
        $region79: #{tpu_custom_call.1} parent=59 // pred_region
          %426 = vst [vmem:[#allocation2] sm:$0xf] 0.0
          %427 = vst [vmem:[#allocation3] sm:$0x3] 0.0
          %428 = vst [vmem:[#allocation4] sm:$0x3] 0.0
        $region80: #{tpu_custom_call.1} parent=59 // pred_fallthru
          _
        %p429 = scmp.eq.s32.totalorder %s31, 1
        %p430 = pnand %p429, %p421
        %p431 = pneg %p430
        // Predicated region
        $region81: #{tpu_custom_call.1} parent=59 // pred_check
          _
        $region82: #{tpu_custom_call.1} parent=59 // pred_check_branch
          %433 = sbr.rel (%p430) target = $region84
        $region83: #{tpu_custom_call.1} parent=59 // pred_region
          %v434 = vld [vmem:[#allocation2] ss:$2 sm:$0x3]
          %v435 = vmul.f32 %v434, 0.125
          %s436 = scalar_lea.vmem [#allocation2], 1
          %v437 = vld [vmem:[%s436] ss:$2 sm:$0x3]
          %v438 = vmul.f32 %v437, 0.125
          %v439 = vmul.f32 %v435, %v435
          %v440 = vsub.f32 %v438, %v439
          %v441 = vmax.f32 %v440, 0.0
          %v442 = vld [vmem:[%s2] sm:$0x3]
          %v443 = vadd.f32 %v441, 1e-05
          %v444 = vrsqrt.pop %v443
          %v445 = vmul.f32 %v442, %v444
          %v446 = vld [vmem:[%s3] sm:$0x3]
          %v447 = vmul.f32 %v435, %v445
          %v448 = vsub.f32 %v446, %v447
          %v449 = vlaneseq
          %vm450 = vcmp.ge.s32.totalorder %v449, 0
          %vm451 = vcmp.lt.s32.totalorder %v449, 256
          %vm452 = vmand %vm450, %vm451
          %453 = vst.msk [vmem:[#allocation2] ss:$2 sm:$0x3] %vm452, %v445
          %454 = vst.msk [vmem:[%s436] ss:$2 sm:$0x3] %vm452, %v448
        $region84: #{tpu_custom_call.1} parent=59 // pred_fallthru
          _
        %p455 = scmp.eq.s32.totalorder %s31, 2
        %p456 = pnand %p455, %p421
        %p457 = pneg %p456
        // Predicated region
        $region85: #{tpu_custom_call.1} parent=59 // pred_check
          _
        $region86: #{tpu_custom_call.1} parent=59 // pred_check_branch
          %459 = sbr.rel (%p456) target = $region88
        $region87: #{tpu_custom_call.1} parent=59 // pred_region
          %v460 = vld [vmem:[#allocation3] sm:$0x1]
          %v461 = vmul.f32 %v460, 0.125
          %v462 = vld [vmem:[#allocation3 + $0x1] sm:$0x1]
          %v463 = vmul.f32 %v462, 0.125
          %v464 = vmul.f32 %v461, %v461
          %v465 = vsub.f32 %v463, %v464
          %v466 = vmax.f32 %v465, 0.0
          %v467 = vld [vmem:[%s5] sm:$0x1]
          %v468 = vadd.f32 %v466, 1e-05
          %v469 = vrsqrt.pop %v468
          %v470 = vmul.f32 %v467, %v469
          %v471 = vld [vmem:[%s6] sm:$0x1]
          %v472 = vmul.f32 %v461, %v470
          %v473 = vsub.f32 %v471, %v472
          %474 = vst [vmem:[#allocation3] sm:$0x1] %v470
          %475 = vst [vmem:[#allocation3 + $0x1] sm:$0x1] %v473
        $region88: #{tpu_custom_call.1} parent=59 // pred_fallthru
          _
        %p476 = scmp.eq.s32.totalorder %s31, 3
        %p477 = pnand %p476, %p421
        %p478 = pneg %p477
        // Predicated region
        $region89: #{tpu_custom_call.1} parent=59 // pred_check
          _
        $region90: #{tpu_custom_call.1} parent=59 // pred_check_branch
          %480 = sbr.rel (%p477) target = $region92
        $region91: #{tpu_custom_call.1} parent=59 // pred_region
          %v481 = vld [vmem:[#allocation4] sm:$0x1]
          %v482 = vmul.f32 %v481, 0.125
          %v483 = vld [vmem:[#allocation4 + $0x1] sm:$0x1]
          %v484 = vmul.f32 %v483, 0.125
          %v485 = vmul.f32 %v482, %v482
          %v486 = vsub.f32 %v484, %v485
          %v487 = vmax.f32 %v486, 0.0
          %v488 = vld [vmem:[%s8] sm:$0x1]
          %v489 = vadd.f32 %v487, 1e-05
          %v490 = vrsqrt.pop %v489
          %v491 = vmul.f32 %v488, %v490
          %v492 = vld [vmem:[%s9] sm:$0x1]
          %v493 = vmul.f32 %v482, %v491
          %v494 = vsub.f32 %v492, %v493
          %495 = vst [vmem:[#allocation4] sm:$0x1] %v491
          %496 = vst [vmem:[#allocation4 + $0x1] sm:$0x1] %v494
        $region92: #{tpu_custom_call.1} parent=59 // pred_fallthru
          _
        %v497 = vld [vmem:[#allocation5] sm:$0xff]
        // Predicated region
        $region93: #{tpu_custom_call.1} parent=59 // pred_check
          %p498 = pneg %p420
        $region94: #{tpu_custom_call.1} parent=59 // pred_check_branch
          %500 = sbr.rel (%p498) target = $region96
        $region95: #{tpu_custom_call.1} parent=59 // pred_region
          %v501 = vld [vmem:[#allocation8] sm:$0xff]
          %v502 = vld [vmem:[#allocation8 + $0x8] sm:$0xff]
          %v503 = vld [vmem:[#allocation8 + $0x10] sm:$0xff]
          %v504 = vld [vmem:[#allocation8 + $0x18] sm:$0xff]
          %v505 = vld [vmem:[#allocation8 + $0x20] sm:$0xff]
          %v506 = vld [vmem:[#allocation8 + $0x28] sm:$0xff]
          %v507 = vld [vmem:[#allocation8 + $0x30] sm:$0xff]
          %v508 = vld [vmem:[#allocation8 + $0x38] sm:$0xff]
          %vm509 = vcmask 261120
          %v511 = vsel %vm509, %v497, 0
          %513 = vmatprep.subr.mxu0 %v502
          %514 = vmatpush1.msra.mxu0 %v501
          %515 = vmatprep.subr.mxu0 %v504
          %516 = vmatpush1.msra.mxu0 %v503
          %517 = vmatprep.subr.mxu0 %v506
          %518 = vmatpush1.msra.mxu0 %v505
          %519 = vmatprep.subr.mxu0 %v508
          %520 = vmatpush1.msra.mxu0 %v507
          %521 = vmatprep.subr.mxu0 0.0
          %522 = vmatpush1.msra.mxu0 0.0
          %523 = vmatprep.subr.mxu0 0.0
          %524 = vmatpush1.msra.mxu0 0.0
          %525 = vmatprep.subr.mxu0 0.0
          %526 = vmatpush1.msra.mxu0 0.0
          %527 = vmatprep.subr.mxu0 0.0
          %528 = vmatpush1.msra.mxu0 0.0
          %529 = vmatprep.subr.mxu0 0.0
          %530 = vmatpush1.msra.mxu0 0.0
          %531 = vmatprep.subr.mxu0 0.0
          %532 = vmatpush1.msra.mxu0 0.0
          %533 = vmatprep.subr.mxu0 0.0
          %534 = vmatpush1.msra.mxu0 0.0
          %535 = vmatprep.subr.mxu0 0.0
          %536 = vmatpush1.msra.mxu0 0.0
          %537 = vmatprep.subr.mxu0 0.0
          %538 = vmatpush1.msra.mxu0 0.0
          %539 = vmatprep.subr.mxu0 0.0
          %540 = vmatpush1.msra.mxu0 0.0
          %541 = vmatprep.subr.mxu0 0.0
          %542 = vmatpush1.msra.mxu0 0.0
          %543 = vmatprep.subr.mxu0 0.0
          %544 = vmatpush1.msra.mxu0 0.0
          %545 = vmatprep.subr.mxu0 0.0
          %546 = vmatpush1.msra.mxu0 0.0
          %547 = vmatprep.subr.mxu0 0.0
          %548 = vmatpush1.msra.mxu0 0.0
          %549 = vmatprep.subr.mxu0 0.0
          %550 = vmatpush1.msra.mxu0 0.0
          %551 = vmatprep.subr.mxu0 0.0
          %552 = vmatpush1.msra.mxu0 0.0
          %553 = vmatprep.subr.mxu0 0.0
          %554 = vmatpush1.msra.mxu0 0.0
          %555 = vmatprep.subr.mxu0 0.0
          %556 = vmatpush1.msra.mxu0 0.0
          %557 = vmatprep.subr.mxu0 0.0
          %558 = vmatpush1.msra.mxu0 0.0
          %559 = vmatprep.subr.mxu0 0.0
          %560 = vmatpush1.msra.mxu0 0.0
          %561 = vmatprep.subr.mxu0 0.0
          %562 = vmatpush1.msra.mxu0 0.0
          %563 = vmatprep.subr.mxu0 0.0
          %564 = vmatpush1.msra.mxu0 0.0
          %565 = vmatprep.subr.mxu0 0.0
          %566 = vmatpush1.msra.mxu0 0.0
          %567 = vmatprep.subr.mxu0 0.0
          %568 = vmatpush1.msra.mxu0 0.0
          %569 = vmatprep.subr.mxu0 0.0
          %570 = vmatpush1.msra.mxu0 0.0
          %571 = vmatprep.subr.mxu0 0.0
          %572 = vmatpush1.msra.mxu0 0.0
          %573 = vmatprep.subr.mxu0 0.0
          %574 = vmatpush1.msra.mxu0 0.0
          %575 = vmatprep.subr.mxu0 0.0
          %576 = vmatpush1.msra.mxu0 0.0
          %577 = vmatprep.mubr.f32.mxu0 0.0
          %578 = vmatmul.mubr.f32.gmra.mrb[0].mxu0 %v511
          %v579 = vpop.f32.mrb[0].mxu0
          %v580 = vadd.f32 0.0, %v579
          %v581 = vpop.f32.mrb[0].mxu0
          %v582 = vadd.f32 0.0, %v581
          %583 = vdwg.mxu0
          %v584 = vld [vmem:[#allocation2] ss:$2 sm:$0x3]
          %vm585 = vcmask 64512
          %v587 = vsel %vm585, 1.0, 0
          %589 = vmatprep.subr.mxu0 %v582
          %590 = vmatpush1.msra.mxu0 %v580
          %591 = vmatprep.subr.mxu0 0.0
          %592 = vmatpush1.msra.mxu0 0.0
          %593 = vmatprep.subr.mxu0 0.0
          %594 = vmatpush1.msra.mxu0 0.0
          %595 = vmatprep.subr.mxu0 0.0
          %596 = vmatpush1.msra.mxu0 0.0
          %597 = vmatprep.subr.mxu0 0.0
          %598 = vmatpush1.msra.mxu0 0.0
          %599 = vmatprep.subr.mxu0 0.0
          %600 = vmatpush1.msra.mxu0 0.0
          %601 = vmatprep.subr.mxu0 0.0
          %602 = vmatpush1.msra.mxu0 0.0
          %603 = vmatprep.subr.mxu0 0.0
          %604 = vmatpush1.msra.mxu0 0.0
          %605 = vmatprep.subr.mxu0 0.0
          %606 = vmatpush1.msra.mxu0 0.0
          %607 = vmatprep.subr.mxu0 0.0
          %608 = vmatpush1.msra.mxu0 0.0
          %609 = vmatprep.subr.mxu0 0.0
          %610 = vmatpush1.msra.mxu0 0.0
          %611 = vmatprep.subr.mxu0 0.0
          %612 = vmatpush1.msra.mxu0 0.0
          %613 = vmatprep.subr.mxu0 0.0
          %614 = vmatpush1.msra.mxu0 0.0
          %615 = vmatprep.subr.mxu0 0.0
          %616 = vmatpush1.msra.mxu0 0.0
          %617 = vmatprep.subr.mxu0 0.0
          %618 = vmatpush1.msra.mxu0 0.0
          %619 = vmatprep.subr.mxu0 0.0
          %620 = vmatpush1.msra.mxu0 0.0
          %621 = vmatprep.subr.mxu0 0.0
          %622 = vmatpush1.msra.mxu0 0.0
          %623 = vmatprep.subr.mxu0 0.0
          %624 = vmatpush1.msra.mxu0 0.0
          %625 = vmatprep.subr.mxu0 0.0
          %626 = vmatpush1.msra.mxu0 0.0
          %627 = vmatprep.subr.mxu0 0.0
          %628 = vmatpush1.msra.mxu0 0.0
          %629 = vmatprep.subr.mxu0 0.0
          %630 = vmatpush1.msra.mxu0 0.0
          %631 = vmatprep.subr.mxu0 0.0
          %632 = vmatpush1.msra.mxu0 0.0
          %633 = vmatprep.subr.mxu0 0.0
          %634 = vmatpush1.msra.mxu0 0.0
          %635 = vmatprep.subr.mxu0 0.0
          %636 = vmatpush1.msra.mxu0 0.0
          %637 = vmatprep.subr.mxu0 0.0
          %638 = vmatpush1.msra.mxu0 0.0
          %639 = vmatprep.subr.mxu0 0.0
          %640 = vmatpush1.msra.mxu0 0.0
          %641 = vmatprep.subr.mxu0 0.0
          %642 = vmatpush1.msra.mxu0 0.0
          %643 = vmatprep.subr.mxu0 0.0
          %644 = vmatpush1.msra.mxu0 0.0
          %645 = vmatprep.subr.mxu0 0.0
          %646 = vmatpush1.msra.mxu0 0.0
          %647 = vmatprep.subr.mxu0 0.0
          %648 = vmatpush1.msra.mxu0 0.0
          %649 = vmatprep.subr.mxu0 0.0
          %650 = vmatpush1.msra.mxu0 0.0
          %651 = vmatprep.subr.mxu0 0.0
          %652 = vmatpush1.msra.mxu0 0.0
          %653 = vmatprep.mubr.f32.mxu0 0.0
          %654 = vmatmul.mubr.f32.gmra.mrb[0].mxu0 %v587
          %v655 = vpop.f32.mrb[0].mxu0
          %v656 = vadd.f32 0.0, %v655
          %v657 = vpop.f32.mrb[0].mxu0
          %v658 = vadd.f32 0.0, %v657
          %659 = vdwg.mxu0
          %v662 = vcombine.low %v656, %v658
          %v664 = vunpack.c.l.s4 1966171168
          %v665 = vunpack.c.0.s8 %v664
          %v666 = vlaneseq
          %v667 = vshrl.u32 %v666, 7
          %v668 = vsub.s32 %v665, %v667
          %v669 = vrot.slane %v662, %v668
          %v671 = vunpack.c.l.s4 1966171168
          %v672 = vunpack.c.0.s8 %v671
          %v673 = vlaneseq
          %v674 = vshrl.u32 %v673, 7
          %v675 = vsub.s32 %v672, %v674
          %v676 = vrot.slane %v669, %v675
          %v678 = vadd.f32 %v584, %v676
          %v679 = vlaneseq
          %vm680 = vcmp.ge.s32.totalorder %v679, 0
          %vm681 = vcmp.lt.s32.totalorder %v679, 256
          %vm682 = vmand %vm680, %vm681
          %683 = vst.msk [vmem:[#allocation2] ss:$2 sm:$0x3] %vm682, %v678
          %s684 = scalar_lea.vmem [#allocation2], 1
          %v685 = vld [vmem:[%s684] ss:$2 sm:$0x3]
          %v686 = vmul.f32 %v580, %v580
          %v687 = vmul.f32 %v582, %v582
          %688 = vmatprep.subr.mxu0 %v687
          %689 = vmatpush1.msra.mxu0 %v686
          %690 = vmatprep.subr.mxu0 0.0
          %691 = vmatpush1.msra.mxu0 0.0
          %692 = vmatprep.subr.mxu0 0.0
          %693 = vmatpush1.msra.mxu0 0.0
          %694 = vmatprep.subr.mxu0 0.0
          %695 = vmatpush1.msra.mxu0 0.0
          %696 = vmatprep.subr.mxu0 0.0
          %697 = vmatpush1.msra.mxu0 0.0
          %698 = vmatprep.subr.mxu0 0.0
          %699 = vmatpush1.msra.mxu0 0.0
          %700 = vmatprep.subr.mxu0 0.0
          %701 = vmatpush1.msra.mxu0 0.0
          %702 = vmatprep.subr.mxu0 0.0
          %703 = vmatpush1.msra.mxu0 0.0
          %704 = vmatprep.subr.mxu0 0.0
          %705 = vmatpush1.msra.mxu0 0.0
          %706 = vmatprep.subr.mxu0 0.0
          %707 = vmatpush1.msra.mxu0 0.0
          %708 = vmatprep.subr.mxu0 0.0
          %709 = vmatpush1.msra.mxu0 0.0
          %710 = vmatprep.subr.mxu0 0.0
          %711 = vmatpush1.msra.mxu0 0.0
          %712 = vmatprep.subr.mxu0 0.0
          %713 = vmatpush1.msra.mxu0 0.0
          %714 = vmatprep.subr.mxu0 0.0
          %715 = vmatpush1.msra.mxu0 0.0
          %716 = vmatprep.subr.mxu0 0.0
          %717 = vmatpush1.msra.mxu0 0.0
          %718 = vmatprep.subr.mxu0 0.0
          %719 = vmatpush1.msra.mxu0 0.0
          %720 = vmatprep.subr.mxu0 0.0
          %721 = vmatpush1.msra.mxu0 0.0
          %722 = vmatprep.subr.mxu0 0.0
          %723 = vmatpush1.msra.mxu0 0.0
          %724 = vmatprep.subr.mxu0 0.0
          %725 = vmatpush1.msra.mxu0 0.0
          %726 = vmatprep.subr.mxu0 0.0
          %727 = vmatpush1.msra.mxu0 0.0
          %728 = vmatprep.subr.mxu0 0.0
          %729 = vmatpush1.msra.mxu0 0.0
          %730 = vmatprep.subr.mxu0 0.0
          %731 = vmatpush1.msra.mxu0 0.0
          %732 = vmatprep.subr.mxu0 0.0
          %733 = vmatpush1.msra.mxu0 0.0
          %734 = vmatprep.subr.mxu0 0.0
          %735 = vmatpush1.msra.mxu0 0.0
          %736 = vmatprep.subr.mxu0 0.0
          %737 = vmatpush1.msra.mxu0 0.0
          %738 = vmatprep.subr.mxu0 0.0
          %739 = vmatpush1.msra.mxu0 0.0
          %740 = vmatprep.subr.mxu0 0.0
          %741 = vmatpush1.msra.mxu0 0.0
          %742 = vmatprep.subr.mxu0 0.0
          %743 = vmatpush1.msra.mxu0 0.0
          %744 = vmatprep.subr.mxu0 0.0
          %745 = vmatpush1.msra.mxu0 0.0
          %746 = vmatprep.subr.mxu0 0.0
          %747 = vmatpush1.msra.mxu0 0.0
          %748 = vmatprep.subr.mxu0 0.0
          %749 = vmatpush1.msra.mxu0 0.0
          %750 = vmatprep.subr.mxu0 0.0
          %751 = vmatpush1.msra.mxu0 0.0
          %752 = vmatprep.mubr.f32.mxu0 0.0
          %753 = vmatmul.mubr.f32.gmra.mrb[0].mxu0 %v587
          %v754 = vpop.f32.mrb[0].mxu0
          %v755 = vadd.f32 0.0, %v754
          %v756 = vpop.f32.mrb[0].mxu0
          %v757 = vadd.f32 0.0, %v756
          %758 = vdwg.mxu0
          %v761 = vcombine.low %v755, %v757
          %v763 = vunpack.c.l.s4 1966171168
          %v764 = vunpack.c.0.s8 %v763
          %v765 = vlaneseq
          %v766 = vshrl.u32 %v765, 7
          %v767 = vsub.s32 %v764, %v766
          %v768 = vrot.slane %v761, %v767
          %v770 = vunpack.c.l.s4 1966171168
          %v771 = vunpack.c.0.s8 %v770
          %v772 = vlaneseq
          %v773 = vshrl.u32 %v772, 7
          %v774 = vsub.s32 %v771, %v773
          %v775 = vrot.slane %v768, %v774
          %v777 = vadd.f32 %v685, %v775
          %778 = vst.msk [vmem:[%s684] ss:$2 sm:$0x3] %vm682, %v777
        $region96: #{tpu_custom_call.1} parent=59 // pred_fallthru
          _
        // Predicated region
        $region97: #{tpu_custom_call.1} parent=59 // pred_check
          %p779 = pneg %p429
        $region98: #{tpu_custom_call.1} parent=59 // pred_check_branch
          %781 = sbr.rel (%p779) target = $region100
        $region99: #{tpu_custom_call.1} parent=59 // pred_region
          %v782 = vld [vmem:[#allocation8] sm:$0xff]
          %v783 = vld [vmem:[#allocation8 + $0x8] sm:$0xff]
          %v784 = vld [vmem:[#allocation8 + $0x10] sm:$0xff]
          %v785 = vld [vmem:[#allocation8 + $0x18] sm:$0xff]
          %v786 = vld [vmem:[#allocation8 + $0x20] sm:$0xff]
          %v787 = vld [vmem:[#allocation8 + $0x28] sm:$0xff]
          %v788 = vld [vmem:[#allocation8 + $0x30] sm:$0xff]
          %v789 = vld [vmem:[#allocation8 + $0x38] sm:$0xff]
          %vm790 = vcmask 261120
          %v792 = vsel %vm790, %v497, 0
          %794 = vmatprep.subr.mxu0 %v783
          %795 = vmatpush1.msra.mxu0 %v782
          %796 = vmatprep.subr.mxu0 %v785
          %797 = vmatpush1.msra.mxu0 %v784
          %798 = vmatprep.subr.mxu0 %v787
          %799 = vmatpush1.msra.mxu0 %v786
          %800 = vmatprep.subr.mxu0 %v789
          %801 = vmatpush1.msra.mxu0 %v788
          %802 = vmatprep.subr.mxu0 0.0
          %803 = vmatpush1.msra.mxu0 0.0
          %804 = vmatprep.subr.mxu0 0.0
          %805 = vmatpush1.msra.mxu0 0.0
          %806 = vmatprep.subr.mxu0 0.0
          %807 = vmatpush1.msra.mxu0 0.0
          %808 = vmatprep.subr.mxu0 0.0
          %809 = vmatpush1.msra.mxu0 0.0
          %810 = vmatprep.subr.mxu0 0.0
          %811 = vmatpush1.msra.mxu0 0.0
          %812 = vmatprep.subr.mxu0 0.0
          %813 = vmatpush1.msra.mxu0 0.0
          %814 = vmatprep.subr.mxu0 0.0
          %815 = vmatpush1.msra.mxu0 0.0
          %816 = vmatprep.subr.mxu0 0.0
          %817 = vmatpush1.msra.mxu0 0.0
          %818 = vmatprep.subr.mxu0 0.0
          %819 = vmatpush1.msra.mxu0 0.0
          %820 = vmatprep.subr.mxu0 0.0
          %821 = vmatpush1.msra.mxu0 0.0
          %822 = vmatprep.subr.mxu0 0.0
          %823 = vmatpush1.msra.mxu0 0.0
          %824 = vmatprep.subr.mxu0 0.0
          %825 = vmatpush1.msra.mxu0 0.0
          %826 = vmatprep.subr.mxu0 0.0
          %827 = vmatpush1.msra.mxu0 0.0
          %828 = vmatprep.subr.mxu0 0.0
          %829 = vmatpush1.msra.mxu0 0.0
          %830 = vmatprep.subr.mxu0 0.0
          %831 = vmatpush1.msra.mxu0 0.0
          %832 = vmatprep.subr.mxu0 0.0
          %833 = vmatpush1.msra.mxu0 0.0
          %834 = vmatprep.subr.mxu0 0.0
          %835 = vmatpush1.msra.mxu0 0.0
          %836 = vmatprep.subr.mxu0 0.0
          %837 = vmatpush1.msra.mxu0 0.0
          %838 = vmatprep.subr.mxu0 0.0
          %839 = vmatpush1.msra.mxu0 0.0
          %840 = vmatprep.subr.mxu0 0.0
          %841 = vmatpush1.msra.mxu0 0.0
          %842 = vmatprep.subr.mxu0 0.0
          %843 = vmatpush1.msra.mxu0 0.0
          %844 = vmatprep.subr.mxu0 0.0
          %845 = vmatpush1.msra.mxu0 0.0
          %846 = vmatprep.subr.mxu0 0.0
          %847 = vmatpush1.msra.mxu0 0.0
          %848 = vmatprep.subr.mxu0 0.0
          %849 = vmatpush1.msra.mxu0 0.0
          %850 = vmatprep.subr.mxu0 0.0
          %851 = vmatpush1.msra.mxu0 0.0
          %852 = vmatprep.subr.mxu0 0.0
          %853 = vmatpush1.msra.mxu0 0.0
          %854 = vmatprep.subr.mxu0 0.0
          %855 = vmatpush1.msra.mxu0 0.0
          %856 = vmatprep.subr.mxu0 0.0
          %857 = vmatpush1.msra.mxu0 0.0
          %858 = vmatprep.mubr.f32.mxu0 0.0
          %859 = vmatmul.mubr.f32.gmra.mrb[0].mxu0 %v792
          %v860 = vpop.f32.mrb[0].mxu0
          %v861 = vadd.f32 0.0, %v860
          %v862 = vpop.f32.mrb[0].mxu0
          %v863 = vadd.f32 0.0, %v862
          %864 = vdwg.mxu0
          %v865 = vld [vmem:[#allocation2] ss:$2 sm:$0x3]
          %s866 = scalar_lea.vmem [#allocation2], 1
          %v867 = vld [vmem:[%s866] ss:$2 sm:$0x3]
          %v869 = vlaneseq
          %v870 = vshrl.u32 %v869, 7
          %v871 = vsub.s32 0, %v870
          %v872 = vrot.slane %v865, %v871
          %v873 = vlaneseq
          %v874 = vshrl.u32 %v873, 7
          %v875 = vsub.s32 1, %v874
          %v876 = vrot.slane %v865, %v875
          %v879 = vmul.f32 %v861, %v872
          %v880 = vmul.f32 %v863, %v876
          %v882 = vlaneseq
          %v883 = vshrl.u32 %v882, 7
          %v884 = vsub.s32 0, %v883
          %v885 = vrot.slane %v867, %v884
          %v886 = vlaneseq
          %v887 = vshrl.u32 %v886, 7
          %v888 = vsub.s32 1, %v887
          %v889 = vrot.slane %v867, %v888
          %v892 = vadd.f32 %v879, %v885
          %v893 = vadd.f32 %v880, %v889
          %v894 = vmax.f32 %v892, 0.0
          %v895 = vmax.f32 %v893, 0.0
          %v896 = vld [vmem:[#allocation10] sm:$0xff]
          %v897 = vld [vmem:[#allocation10 + $0x8] sm:$0xff]
          %v898 = vld [vmem:[#allocation10 + $0x10] sm:$0xff]
          %v899 = vld [vmem:[#allocation10 + $0x18] sm:$0xff]
          %v900 = vld [vmem:[#allocation10 + $0x20] sm:$0xff]
          %v901 = vld [vmem:[#allocation10 + $0x28] sm:$0xff]
          %v902 = vld [vmem:[#allocation10 + $0x30] sm:$0xff]
          %v903 = vld [vmem:[#allocation10 + $0x38] sm:$0xff]
          %v904 = vld [vmem:[#allocation10 + $0x40] sm:$0xff]
          %v905 = vld [vmem:[#allocation10 + $0x48] sm:$0xff]
          %v906 = vld [vmem:[#allocation10 + $0x50] sm:$0xff]
          %v907 = vld [vmem:[#allocation10 + $0x58] sm:$0xff]
          %v908 = vld [vmem:[#allocation10 + $0x60] sm:$0xff]
          %v909 = vld [vmem:[#allocation10 + $0x68] sm:$0xff]
          %v910 = vld [vmem:[#allocation10 + $0x70] sm:$0xff]
          %v911 = vld [vmem:[#allocation10 + $0x78] sm:$0xff]
          %v912 = vld [vmem:[#allocation10 + $0x80] sm:$0xff]
          %v913 = vld [vmem:[#allocation10 + $0x88] sm:$0xff]
          %v914 = vld [vmem:[#allocation10 + $0x90] sm:$0xff]
          %v915 = vld [vmem:[#allocation10 + $0x98] sm:$0xff]
          %v916 = vld [vmem:[#allocation10 + $0xa0] sm:$0xff]
          %v917 = vld [vmem:[#allocation10 + $0xa8] sm:$0xff]
          %v918 = vld [vmem:[#allocation10 + $0xb0] sm:$0xff]
          %v919 = vld [vmem:[#allocation10 + $0xb8] sm:$0xff]
          %v920 = vld [vmem:[#allocation10 + $0xc0] sm:$0xff]
          %v921 = vld [vmem:[#allocation10 + $0xc8] sm:$0xff]
          %v922 = vld [vmem:[#allocation10 + $0xd0] sm:$0xff]
          %v923 = vld [vmem:[#allocation10 + $0xd8] sm:$0xff]
          %v924 = vld [vmem:[#allocation10 + $0xe0] sm:$0xff]
          %v925 = vld [vmem:[#allocation10 + $0xe8] sm:$0xff]
          %v926 = vld [vmem:[#allocation10 + $0xf0] sm:$0xff]
          %v927 = vld [vmem:[#allocation10 + $0xf8] sm:$0xff]
          %928 = vmatprep.subr.mxu0 0.0
          %929 = vmatpush1.msra.mxu0 %v896
          %930 = vmatprep.subr.mxu0 0.0
          %931 = vmatpush1.msra.mxu0 %v897
          %932 = vmatprep.subr.mxu0 0.0
          %933 = vmatpush1.msra.mxu0 %v898
          %934 = vmatprep.subr.mxu0 0.0
          %935 = vmatpush1.msra.mxu0 %v899
          %936 = vmatprep.subr.mxu0 0.0
          %937 = vmatpush1.msra.mxu0 %v900
          %938 = vmatprep.subr.mxu0 0.0
          %939 = vmatpush1.msra.mxu0 %v901
          %940 = vmatprep.subr.mxu0 0.0
          %941 = vmatpush1.msra.mxu0 %v902
          %942 = vmatprep.subr.mxu0 0.0
          %943 = vmatpush1.msra.mxu0 %v903
          %944 = vmatprep.subr.mxu0 0.0
          %945 = vmatpush1.msra.mxu0 %v904
          %946 = vmatprep.subr.mxu0 0.0
          %947 = vmatpush1.msra.mxu0 %v905
          %948 = vmatprep.subr.mxu0 0.0
          %949 = vmatpush1.msra.mxu0 %v906
          %950 = vmatprep.subr.mxu0 0.0
          %951 = vmatpush1.msra.mxu0 %v907
          %952 = vmatprep.subr.mxu0 0.0
          %953 = vmatpush1.msra.mxu0 %v908
          %954 = vmatprep.subr.mxu0 0.0
          %955 = vmatpush1.msra.mxu0 %v909
          %956 = vmatprep.subr.mxu0 0.0
          %957 = vmatpush1.msra.mxu0 %v910
          %958 = vmatprep.subr.mxu0 0.0
          %959 = vmatpush1.msra.mxu0 %v911
          %960 = vmatprep.subr.mxu0 0.0
          %961 = vmatpush1.msra.mxu0 %v912
          %962 = vmatprep.subr.mxu0 0.0
          %963 = vmatpush1.msra.mxu0 %v913
          %964 = vmatprep.subr.mxu0 0.0
          %965 = vmatpush1.msra.mxu0 %v914
          %966 = vmatprep.subr.mxu0 0.0
          %967 = vmatpush1.msra.mxu0 %v915
          %968 = vmatprep.subr.mxu0 0.0
          %969 = vmatpush1.msra.mxu0 %v916
          %970 = vmatprep.subr.mxu0 0.0
          %971 = vmatpush1.msra.mxu0 %v917
          %972 = vmatprep.subr.mxu0 0.0
          %973 = vmatpush1.msra.mxu0 %v918
          %974 = vmatprep.subr.mxu0 0.0
          %975 = vmatpush1.msra.mxu0 %v919
          %976 = vmatprep.subr.mxu0 0.0
          %977 = vmatpush1.msra.mxu0 %v920
          %978 = vmatprep.subr.mxu0 0.0
          %979 = vmatpush1.msra.mxu0 %v921
          %980 = vmatprep.subr.mxu0 0.0
          %981 = vmatpush1.msra.mxu0 %v922
          %982 = vmatprep.subr.mxu0 0.0
          %983 = vmatpush1.msra.mxu0 %v923
          %984 = vmatprep.subr.mxu0 0.0
          %985 = vmatpush1.msra.mxu0 %v924
          %986 = vmatprep.subr.mxu0 0.0
          %987 = vmatpush1.msra.mxu0 %v925
          %988 = vmatprep.subr.mxu0 0.0
          %989 = vmatpush1.msra.mxu0 %v926
          %990 = vmatprep.subr.mxu0 0.0
          %991 = vmatpush1.msra.mxu0 %v927
          %992 = vmatprep.mubr.f32.mxu0 %v895
          %993 = vmatmul.mubr.f32.gmra.mrb[0].mxu0 %v894
          %v994 = vpop.f32.mrb[0].mxu0
          %v995 = vadd.f32 0.0, %v994
          %v996 = vpop.f32.mrb[0].mxu0
          %997 = vdwg.mxu0
          %v998 = vld [vmem:[#allocation3] sm:$0x1]
          %vm999 = vcmask 64512
          %v1001 = vsel %vm999, 1.0, 0
          %1003 = vmatprep.subr.mxu0 0.0
          %1004 = vmatpush1.msra.mxu0 %v995
          %1005 = vmatprep.subr.mxu0 0.0
          %1006 = vmatpush1.msra.mxu0 0.0
          %1007 = vmatprep.subr.mxu0 0.0
          %1008 = vmatpush1.msra.mxu0 0.0
          %1009 = vmatprep.subr.mxu0 0.0
          %1010 = vmatpush1.msra.mxu0 0.0
          %1011 = vmatprep.subr.mxu0 0.0
          %1012 = vmatpush1.msra.mxu0 0.0
          %1013 = vmatprep.subr.mxu0 0.0
          %1014 = vmatpush1.msra.mxu0 0.0
          %1015 = vmatprep.subr.mxu0 0.0
          %1016 = vmatpush1.msra.mxu0 0.0
          %1017 = vmatprep.subr.mxu0 0.0
          %1018 = vmatpush1.msra.mxu0 0.0
          %1019 = vmatprep.subr.mxu0 0.0
          %1020 = vmatpush1.msra.mxu0 0.0
          %1021 = vmatprep.subr.mxu0 0.0
          %1022 = vmatpush1.msra.mxu0 0.0
          %1023 = vmatprep.subr.mxu0 0.0
          %1024 = vmatpush1.msra.mxu0 0.0
          %1025 = vmatprep.subr.mxu0 0.0
          %1026 = vmatpush1.msra.mxu0 0.0
          %1027 = vmatprep.subr.mxu0 0.0
          %1028 = vmatpush1.msra.mxu0 0.0
          %1029 = vmatprep.subr.mxu0 0.0
          %1030 = vmatpush1.msra.mxu0 0.0
          %1031 = vmatprep.subr.mxu0 0.0
          %1032 = vmatpush1.msra.mxu0 0.0
          %1033 = vmatprep.subr.mxu0 0.0
          %1034 = vmatpush1.msra.mxu0 0.0
          %1035 = vmatprep.subr.mxu0 0.0
          %1036 = vmatpush1.msra.mxu0 0.0
          %1037 = vmatprep.subr.mxu0 0.0
          %1038 = vmatpush1.msra.mxu0 0.0
          %1039 = vmatprep.subr.mxu0 0.0
          %1040 = vmatpush1.msra.mxu0 0.0
          %1041 = vmatprep.subr.mxu0 0.0
          %1042 = vmatpush1.msra.mxu0 0.0
          %1043 = vmatprep.subr.mxu0 0.0
          %1044 = vmatpush1.msra.mxu0 0.0
          %1045 = vmatprep.subr.mxu0 0.0
          %1046 = vmatpush1.msra.mxu0 0.0
          %1047 = vmatprep.subr.mxu0 0.0
          %1048 = vmatpush1.msra.mxu0 0.0
          %1049 = vmatprep.subr.mxu0 0.0
          %1050 = vmatpush1.msra.mxu0 0.0
          %1051 = vmatprep.subr.mxu0 0.0
          %1052 = vmatpush1.msra.mxu0 0.0
          %1053 = vmatprep.subr.mxu0 0.0
          %1054 = vmatpush1.msra.mxu0 0.0
          %1055 = vmatprep.subr.mxu0 0.0
          %1056 = vmatpush1.msra.mxu0 0.0
          %1057 = vmatprep.subr.mxu0 0.0
          %1058 = vmatpush1.msra.mxu0 0.0
          %1059 = vmatprep.subr.mxu0 0.0
          %1060 = vmatpush1.msra.mxu0 0.0
          %1061 = vmatprep.subr.mxu0 0.0
          %1062 = vmatpush1.msra.mxu0 0.0
          %1063 = vmatprep.subr.mxu0 0.0
          %1064 = vmatpush1.msra.mxu0 0.0
          %1065 = vmatprep.subr.mxu0 0.0
          %1066 = vmatpush1.msra.mxu0 0.0
          %1067 = vmatprep.mubr.f32.mxu0 0.0
          %1068 = vmatmul.mubr.f32.gmra.mrb[0].mxu0 %v1001
          %v1069 = vpop.f32.mrb[0].mxu0
          %v1070 = vadd.f32 0.0, %v1069
          %v1071 = vpop.f32.mrb[0].mxu0
          %1072 = vdwg.mxu0
          %v1073 = vadd.f32 %v998, %v1070
          %1074 = vst [vmem:[#allocation3] sm:$0x1] %v1073
          %v1075 = vld [vmem:[#allocation3 + $0x1] sm:$0x1]
          %v1076 = vmul.f32 %v995, %v995
          %1077 = vmatprep.subr.mxu0 0.0
          %1078 = vmatpush1.msra.mxu0 %v1076
          %1079 = vmatprep.subr.mxu0 0.0
          %1080 = vmatpush1.msra.mxu0 0.0
          %1081 = vmatprep.subr.mxu0 0.0
          %1082 = vmatpush1.msra.mxu0 0.0
          %1083 = vmatprep.subr.mxu0 0.0
          %1084 = vmatpush1.msra.mxu0 0.0
          %1085 = vmatprep.subr.mxu0 0.0
          %1086 = vmatpush1.msra.mxu0 0.0
          %1087 = vmatprep.subr.mxu0 0.0
          %1088 = vmatpush1.msra.mxu0 0.0
          %1089 = vmatprep.subr.mxu0 0.0
          %1090 = vmatpush1.msra.mxu0 0.0
          %1091 = vmatprep.subr.mxu0 0.0
          %1092 = vmatpush1.msra.mxu0 0.0
          %1093 = vmatprep.subr.mxu0 0.0
          %1094 = vmatpush1.msra.mxu0 0.0
          %1095 = vmatprep.subr.mxu0 0.0
          %1096 = vmatpush1.msra.mxu0 0.0
          %1097 = vmatprep.subr.mxu0 0.0
          %1098 = vmatpush1.msra.mxu0 0.0
          %1099 = vmatprep.subr.mxu0 0.0
          %1100 = vmatpush1.msra.mxu0 0.0
          %1101 = vmatprep.subr.mxu0 0.0
          %1102 = vmatpush1.msra.mxu0 0.0
          %1103 = vmatprep.subr.mxu0 0.0
          %1104 = vmatpush1.msra.mxu0 0.0
          %1105 = vmatprep.subr.mxu0 0.0
          %1106 = vmatpush1.msra.mxu0 0.0
          %1107 = vmatprep.subr.mxu0 0.0
          %1108 = vmatpush1.msra.mxu0 0.0
          %1109 = vmatprep.subr.mxu0 0.0
          %1110 = vmatpush1.msra.mxu0 0.0
          %1111 = vmatprep.subr.mxu0 0.0
          %1112 = vmatpush1.msra.mxu0 0.0
          %1113 = vmatprep.subr.mxu0 0.0
          %1114 = vmatpush1.msra.mxu0 0.0
          %1115 = vmatprep.subr.mxu0 0.0
          %1116 = vmatpush1.msra.mxu0 0.0
          %1117 = vmatprep.subr.mxu0 0.0
          %1118 = vmatpush1.msra.mxu0 0.0
          %1119 = vmatprep.subr.mxu0 0.0
          %1120 = vmatpush1.msra.mxu0 0.0
          %1121 = vmatprep.subr.mxu0 0.0
          %1122 = vmatpush1.msra.mxu0 0.0
          %1123 = vmatprep.subr.mxu0 0.0
          %1124 = vmatpush1.msra.mxu0 0.0
          %1125 = vmatprep.subr.mxu0 0.0
          %1126 = vmatpush1.msra.mxu0 0.0
          %1127 = vmatprep.subr.mxu0 0.0
          %1128 = vmatpush1.msra.mxu0 0.0
          %1129 = vmatprep.subr.mxu0 0.0
          %1130 = vmatpush1.msra.mxu0 0.0
          %1131 = vmatprep.subr.mxu0 0.0
          %1132 = vmatpush1.msra.mxu0 0.0
          %1133 = vmatprep.subr.mxu0 0.0
          %1134 = vmatpush1.msra.mxu0 0.0
          %1135 = vmatprep.subr.mxu0 0.0
          %1136 = vmatpush1.msra.mxu0 0.0
          %1137 = vmatprep.subr.mxu0 0.0
          %1138 = vmatpush1.msra.mxu0 0.0
          %1139 = vmatprep.subr.mxu0 0.0
          %1140 = vmatpush1.msra.mxu0 0.0
          %1141 = vmatprep.mubr.f32.mxu0 0.0
          %1142 = vmatmul.mubr.f32.gmra.mrb[0].mxu0 %v1001
          %v1143 = vpop.f32.mrb[0].mxu0
          %v1144 = vadd.f32 0.0, %v1143
          %v1145 = vpop.f32.mrb[0].mxu0
          %1146 = vdwg.mxu0
          %v1147 = vadd.f32 %v1075, %v1144
          %1148 = vst [vmem:[#allocation3 + $0x1] sm:$0x1] %v1147
        $region100: #{tpu_custom_call.1} parent=59 // pred_fallthru
          _
        // Predicated region
        $region101: #{tpu_custom_call.1} parent=59 // pred_check
          %p1149 = pneg %p455
        $region102: #{tpu_custom_call.1} parent=59 // pred_check_branch
          %1151 = sbr.rel (%p1149) target = $region104
        $region103: #{tpu_custom_call.1} parent=59 // pred_region
          %v1152 = vld [vmem:[#allocation8] sm:$0xff]
          %v1153 = vld [vmem:[#allocation8 + $0x8] sm:$0xff]
          %v1154 = vld [vmem:[#allocation8 + $0x10] sm:$0xff]
          %v1155 = vld [vmem:[#allocation8 + $0x18] sm:$0xff]
          %v1156 = vld [vmem:[#allocation8 + $0x20] sm:$0xff]
          %v1157 = vld [vmem:[#allocation8 + $0x28] sm:$0xff]
          %v1158 = vld [vmem:[#allocation8 + $0x30] sm:$0xff]
          %v1159 = vld [vmem:[#allocation8 + $0x38] sm:$0xff]
          %vm1160 = vcmask 261120
          %v1162 = vsel %vm1160, %v497, 0
          %1164 = vmatprep.subr.mxu0 %v1153
          %1165 = vmatpush1.msra.mxu0 %v1152
          %1166 = vmatprep.subr.mxu0 %v1155
          %1167 = vmatpush1.msra.mxu0 %v1154
          %1168 = vmatprep.subr.mxu0 %v1157
          %1169 = vmatpush1.msra.mxu0 %v1156
          %1170 = vmatprep.subr.mxu0 %v1159
          %1171 = vmatpush1.msra.mxu0 %v1158
          %1172 = vmatprep.subr.mxu0 0.0
          %1173 = vmatpush1.msra.mxu0 0.0
          %1174 = vmatprep.subr.mxu0 0.0
          %1175 = vmatpush1.msra.mxu0 0.0
          %1176 = vmatprep.subr.mxu0 0.0
          %1177 = vmatpush1.msra.mxu0 0.0
          %1178 = vmatprep.subr.mxu0 0.0
          %1179 = vmatpush1.msra.mxu0 0.0
          %1180 = vmatprep.subr.mxu0 0.0
          %1181 = vmatpush1.msra.mxu0 0.0
          %1182 = vmatprep.subr.mxu0 0.0
          %1183 = vmatpush1.msra.mxu0 0.0
          %1184 = vmatprep.subr.mxu0 0.0
          %1185 = vmatpush1.msra.mxu0 0.0
          %1186 = vmatprep.subr.mxu0 0.0
          %1187 = vmatpush1.msra.mxu0 0.0
          %1188 = vmatprep.subr.mxu0 0.0
          %1189 = vmatpush1.msra.mxu0 0.0
          %1190 = vmatprep.subr.mxu0 0.0
          %1191 = vmatpush1.msra.mxu0 0.0
          %1192 = vmatprep.subr.mxu0 0.0
          %1193 = vmatpush1.msra.mxu0 0.0
          %1194 = vmatprep.subr.mxu0 0.0
          %1195 = vmatpush1.msra.mxu0 0.0
          %1196 = vmatprep.subr.mxu0 0.0
          %1197 = vmatpush1.msra.mxu0 0.0
          %1198 = vmatprep.subr.mxu0 0.0
          %1199 = vmatpush1.msra.mxu0 0.0
          %1200 = vmatprep.subr.mxu0 0.0
          %1201 = vmatpush1.msra.mxu0 0.0
          %1202 = vmatprep.subr.mxu0 0.0
          %1203 = vmatpush1.msra.mxu0 0.0
          %1204 = vmatprep.subr.mxu0 0.0
          %1205 = vmatpush1.msra.mxu0 0.0
          %1206 = vmatprep.subr.mxu0 0.0
          %1207 = vmatpush1.msra.mxu0 0.0
          %1208 = vmatprep.subr.mxu0 0.0
          %1209 = vmatpush1.msra.mxu0 0.0
          %1210 = vmatprep.subr.mxu0 0.0
          %1211 = vmatpush1.msra.mxu0 0.0
          %1212 = vmatprep.subr.mxu0 0.0
          %1213 = vmatpush1.msra.mxu0 0.0
          %1214 = vmatprep.subr.mxu0 0.0
          %1215 = vmatpush1.msra.mxu0 0.0
          %1216 = vmatprep.subr.mxu0 0.0
          %1217 = vmatpush1.msra.mxu0 0.0
          %1218 = vmatprep.subr.mxu0 0.0
          %1219 = vmatpush1.msra.mxu0 0.0
          %1220 = vmatprep.subr.mxu0 0.0
          %1221 = vmatpush1.msra.mxu0 0.0
          %1222 = vmatprep.subr.mxu0 0.0
          %1223 = vmatpush1.msra.mxu0 0.0
          %1224 = vmatprep.subr.mxu0 0.0
          %1225 = vmatpush1.msra.mxu0 0.0
          %1226 = vmatprep.subr.mxu0 0.0
          %1227 = vmatpush1.msra.mxu0 0.0
          %1228 = vmatprep.mubr.f32.mxu0 0.0
          %1229 = vmatmul.mubr.f32.gmra.mrb[0].mxu0 %v1162
          %v1230 = vpop.f32.mrb[0].mxu0
          %v1231 = vadd.f32 0.0, %v1230
          %v1232 = vpop.f32.mrb[0].mxu0
          %v1233 = vadd.f32 0.0, %v1232
          %1234 = vdwg.mxu0
          %v1235 = vld [vmem:[#allocation2] ss:$2 sm:$0x3]
          %s1236 = scalar_lea.vmem [#allocation2], 1
          %v1237 = vld [vmem:[%s1236] ss:$2 sm:$0x3]
          %v1239 = vlaneseq
          %v1240 = vshrl.u32 %v1239, 7
          %v1241 = vsub.s32 0, %v1240
          %v1242 = vrot.slane %v1235, %v1241
          %v1243 = vlaneseq
          %v1244 = vshrl.u32 %v1243, 7
          %v1245 = vsub.s32 1, %v1244
          %v1246 = vrot.slane %v1235, %v1245
          %v1249 = vmul.f32 %v1231, %v1242
          %v1250 = vmul.f32 %v1233, %v1246
          %v1252 = vlaneseq
          %v1253 = vshrl.u32 %v1252, 7
          %v1254 = vsub.s32 0, %v1253
          %v1255 = vrot.slane %v1237, %v1254
          %v1256 = vlaneseq
          %v1257 = vshrl.u32 %v1256, 7
          %v1258 = vsub.s32 1, %v1257
          %v1259 = vrot.slane %v1237, %v1258
          %v1262 = vadd.f32 %v1249, %v1255
          %v1263 = vadd.f32 %v1250, %v1259
          %v1264 = vmax.f32 %v1262, 0.0
          %v1265 = vmax.f32 %v1263, 0.0
          %v1266 = vld [vmem:[#allocation10] sm:$0xff]
          %v1267 = vld [vmem:[#allocation10 + $0x8] sm:$0xff]
          %v1268 = vld [vmem:[#allocation10 + $0x10] sm:$0xff]
          %v1269 = vld [vmem:[#allocation10 + $0x18] sm:$0xff]
          %v1270 = vld [vmem:[#allocation10 + $0x20] sm:$0xff]
          %v1271 = vld [vmem:[#allocation10 + $0x28] sm:$0xff]
          %v1272 = vld [vmem:[#allocation10 + $0x30] sm:$0xff]
          %v1273 = vld [vmem:[#allocation10 + $0x38] sm:$0xff]
          %v1274 = vld [vmem:[#allocation10 + $0x40] sm:$0xff]
          %v1275 = vld [vmem:[#allocation10 + $0x48] sm:$0xff]
          %v1276 = vld [vmem:[#allocation10 + $0x50] sm:$0xff]
          %v1277 = vld [vmem:[#allocation10 + $0x58] sm:$0xff]
          %v1278 = vld [vmem:[#allocation10 + $0x60] sm:$0xff]
          %v1279 = vld [vmem:[#allocation10 + $0x68] sm:$0xff]
          %v1280 = vld [vmem:[#allocation10 + $0x70] sm:$0xff]
          %v1281 = vld [vmem:[#allocation10 + $0x78] sm:$0xff]
          %v1282 = vld [vmem:[#allocation10 + $0x80] sm:$0xff]
          %v1283 = vld [vmem:[#allocation10 + $0x88] sm:$0xff]
          %v1284 = vld [vmem:[#allocation10 + $0x90] sm:$0xff]
          %v1285 = vld [vmem:[#allocation10 + $0x98] sm:$0xff]
          %v1286 = vld [vmem:[#allocation10 + $0xa0] sm:$0xff]
          %v1287 = vld [vmem:[#allocation10 + $0xa8] sm:$0xff]
          %v1288 = vld [vmem:[#allocation10 + $0xb0] sm:$0xff]
          %v1289 = vld [vmem:[#allocation10 + $0xb8] sm:$0xff]
          %v1290 = vld [vmem:[#allocation10 + $0xc0] sm:$0xff]
          %v1291 = vld [vmem:[#allocation10 + $0xc8] sm:$0xff]
          %v1292 = vld [vmem:[#allocation10 + $0xd0] sm:$0xff]
          %v1293 = vld [vmem:[#allocation10 + $0xd8] sm:$0xff]
          %v1294 = vld [vmem:[#allocation10 + $0xe0] sm:$0xff]
          %v1295 = vld [vmem:[#allocation10 + $0xe8] sm:$0xff]
          %v1296 = vld [vmem:[#allocation10 + $0xf0] sm:$0xff]
          %v1297 = vld [vmem:[#allocation10 + $0xf8] sm:$0xff]
          %1298 = vmatprep.subr.mxu0 0.0
          %1299 = vmatpush1.msra.mxu0 %v1266
          %1300 = vmatprep.subr.mxu0 0.0
          %1301 = vmatpush1.msra.mxu0 %v1267
          %1302 = vmatprep.subr.mxu0 0.0
          %1303 = vmatpush1.msra.mxu0 %v1268
          %1304 = vmatprep.subr.mxu0 0.0
          %1305 = vmatpush1.msra.mxu0 %v1269
          %1306 = vmatprep.subr.mxu0 0.0
          %1307 = vmatpush1.msra.mxu0 %v1270
          %1308 = vmatprep.subr.mxu0 0.0
          %1309 = vmatpush1.msra.mxu0 %v1271
          %1310 = vmatprep.subr.mxu0 0.0
          %1311 = vmatpush1.msra.mxu0 %v1272
          %1312 = vmatprep.subr.mxu0 0.0
          %1313 = vmatpush1.msra.mxu0 %v1273
          %1314 = vmatprep.subr.mxu0 0.0
          %1315 = vmatpush1.msra.mxu0 %v1274
          %1316 = vmatprep.subr.mxu0 0.0
          %1317 = vmatpush1.msra.mxu0 %v1275
          %1318 = vmatprep.subr.mxu0 0.0
          %1319 = vmatpush1.msra.mxu0 %v1276
          %1320 = vmatprep.subr.mxu0 0.0
          %1321 = vmatpush1.msra.mxu0 %v1277
          %1322 = vmatprep.subr.mxu0 0.0
          %1323 = vmatpush1.msra.mxu0 %v1278
          %1324 = vmatprep.subr.mxu0 0.0
          %1325 = vmatpush1.msra.mxu0 %v1279
          %1326 = vmatprep.subr.mxu0 0.0
          %1327 = vmatpush1.msra.mxu0 %v1280
          %1328 = vmatprep.subr.mxu0 0.0
          %1329 = vmatpush1.msra.mxu0 %v1281
          %1330 = vmatprep.subr.mxu0 0.0
          %1331 = vmatpush1.msra.mxu0 %v1282
          %1332 = vmatprep.subr.mxu0 0.0
          %1333 = vmatpush1.msra.mxu0 %v1283
          %1334 = vmatprep.subr.mxu0 0.0
          %1335 = vmatpush1.msra.mxu0 %v1284
          %1336 = vmatprep.subr.mxu0 0.0
          %1337 = vmatpush1.msra.mxu0 %v1285
          %1338 = vmatprep.subr.mxu0 0.0
          %1339 = vmatpush1.msra.mxu0 %v1286
          %1340 = vmatprep.subr.mxu0 0.0
          %1341 = vmatpush1.msra.mxu0 %v1287
          %1342 = vmatprep.subr.mxu0 0.0
          %1343 = vmatpush1.msra.mxu0 %v1288
          %1344 = vmatprep.subr.mxu0 0.0
          %1345 = vmatpush1.msra.mxu0 %v1289
          %1346 = vmatprep.subr.mxu0 0.0
          %1347 = vmatpush1.msra.mxu0 %v1290
          %1348 = vmatprep.subr.mxu0 0.0
          %1349 = vmatpush1.msra.mxu0 %v1291
          %1350 = vmatprep.subr.mxu0 0.0
          %1351 = vmatpush1.msra.mxu0 %v1292
          %1352 = vmatprep.subr.mxu0 0.0
          %1353 = vmatpush1.msra.mxu0 %v1293
          %1354 = vmatprep.subr.mxu0 0.0
          %1355 = vmatpush1.msra.mxu0 %v1294
          %1356 = vmatprep.subr.mxu0 0.0
          %1357 = vmatpush1.msra.mxu0 %v1295
          %1358 = vmatprep.subr.mxu0 0.0
          %1359 = vmatpush1.msra.mxu0 %v1296
          %1360 = vmatprep.subr.mxu0 0.0
          %1361 = vmatpush1.msra.mxu0 %v1297
          %1362 = vmatprep.mubr.f32.mxu0 %v1265
          %1363 = vmatmul.mubr.f32.gmra.mrb[0].mxu0 %v1264
          %v1364 = vpop.f32.mrb[0].mxu0
          %v1365 = vadd.f32 0.0, %v1364
          %v1366 = vpop.f32.mrb[0].mxu0
          %1367 = vdwg.mxu0
          %v1368 = vld [vmem:[#allocation3] sm:$0x1]
          %v1369 = vld [vmem:[#allocation3 + $0x1] sm:$0x1]
          %v1370 = vlaneseq
          %v1371 = vshrl.u32 %v1370, 7
          %v1372 = vsub.s32 0, %v1371
          %v1373 = vrot.slane %v1368, %v1372
          %v1374 = vmul.f32 %v1365, %v1373
          %v1375 = vlaneseq
          %v1376 = vshrl.u32 %v1375, 7
          %v1377 = vsub.s32 0, %v1376
          %v1378 = vrot.slane %v1369, %v1377
          %v1379 = vadd.f32 %v1374, %v1378
          %v1380 = vmax.f32 %v1379, 0.0
          %v1381 = vld [vmem:[#allocation11] sm:$0xff]
          %v1382 = vld [vmem:[#allocation11 + $0x8] sm:$0xff]
          %v1383 = vld [vmem:[#allocation11 + $0x10] sm:$0xff]
          %v1384 = vld [vmem:[#allocation11 + $0x18] sm:$0xff]
          %v1385 = vld [vmem:[#allocation11 + $0x20] sm:$0xff]
          %v1386 = vld [vmem:[#allocation11 + $0x28] sm:$0xff]
          %v1387 = vld [vmem:[#allocation11 + $0x30] sm:$0xff]
          %v1388 = vld [vmem:[#allocation11 + $0x38] sm:$0xff]
          %v1389 = vld [vmem:[#allocation11 + $0x40] sm:$0xff]
          %v1390 = vld [vmem:[#allocation11 + $0x48] sm:$0xff]
          %v1391 = vld [vmem:[#allocation11 + $0x50] sm:$0xff]
          %v1392 = vld [vmem:[#allocation11 + $0x58] sm:$0xff]
          %v1393 = vld [vmem:[#allocation11 + $0x60] sm:$0xff]
          %v1394 = vld [vmem:[#allocation11 + $0x68] sm:$0xff]
          %v1395 = vld [vmem:[#allocation11 + $0x70] sm:$0xff]
          %v1396 = vld [vmem:[#allocation11 + $0x78] sm:$0xff]
          %1397 = vmatprep.subr.mxu0 0.0
          %1398 = vmatpush1.msra.mxu0 %v1381
          %1399 = vmatprep.subr.mxu0 0.0
          %1400 = vmatpush1.msra.mxu0 %v1382
          %1401 = vmatprep.subr.mxu0 0.0
          %1402 = vmatpush1.msra.mxu0 %v1383
          %1403 = vmatprep.subr.mxu0 0.0
          %1404 = vmatpush1.msra.mxu0 %v1384
          %1405 = vmatprep.subr.mxu0 0.0
          %1406 = vmatpush1.msra.mxu0 %v1385
          %1407 = vmatprep.subr.mxu0 0.0
          %1408 = vmatpush1.msra.mxu0 %v1386
          %1409 = vmatprep.subr.mxu0 0.0
          %1410 = vmatpush1.msra.mxu0 %v1387
          %1411 = vmatprep.subr.mxu0 0.0
          %1412 = vmatpush1.msra.mxu0 %v1388
          %1413 = vmatprep.subr.mxu0 0.0
          %1414 = vmatpush1.msra.mxu0 %v1389
          %1415 = vmatprep.subr.mxu0 0.0
          %1416 = vmatpush1.msra.mxu0 %v1390
          %1417 = vmatprep.subr.mxu0 0.0
          %1418 = vmatpush1.msra.mxu0 %v1391
          %1419 = vmatprep.subr.mxu0 0.0
          %1420 = vmatpush1.msra.mxu0 %v1392
          %1421 = vmatprep.subr.mxu0 0.0
          %1422 = vmatpush1.msra.mxu0 %v1393
          %1423 = vmatprep.subr.mxu0 0.0
          %1424 = vmatpush1.msra.mxu0 %v1394
          %1425 = vmatprep.subr.mxu0 0.0
          %1426 = vmatpush1.msra.mxu0 %v1395
          %1427 = vmatprep.subr.mxu0 0.0
          %1428 = vmatpush1.msra.mxu0 %v1396
          %1429 = vmatprep.subr.mxu0 0.0
          %1430 = vmatpush1.msra.mxu0 0.0
          %1431 = vmatprep.subr.mxu0 0.0
          %1432 = vmatpush1.msra.mxu0 0.0
          %1433 = vmatprep.subr.mxu0 0.0
          %1434 = vmatpush1.msra.mxu0 0.0
          %1435 = vmatprep.subr.mxu0 0.0
          %1436 = vmatpush1.msra.mxu0 0.0
          %1437 = vmatprep.subr.mxu0 0.0
          %1438 = vmatpush1.msra.mxu0 0.0
          %1439 = vmatprep.subr.mxu0 0.0
          %1440 = vmatpush1.msra.mxu0 0.0
          %1441 = vmatprep.subr.mxu0 0.0
          %1442 = vmatpush1.msra.mxu0 0.0
          %1443 = vmatprep.subr.mxu0 0.0
          %1444 = vmatpush1.msra.mxu0 0.0
          %1445 = vmatprep.subr.mxu0 0.0
          %1446 = vmatpush1.msra.mxu0 0.0
          %1447 = vmatprep.subr.mxu0 0.0
          %1448 = vmatpush1.msra.mxu0 0.0
          %1449 = vmatprep.subr.mxu0 0.0
          %1450 = vmatpush1.msra.mxu0 0.0
          %1451 = vmatprep.subr.mxu0 0.0
          %1452 = vmatpush1.msra.mxu0 0.0
          %1453 = vmatprep.subr.mxu0 0.0
          %1454 = vmatpush1.msra.mxu0 0.0
          %1455 = vmatprep.subr.mxu0 0.0
          %1456 = vmatpush1.msra.mxu0 0.0
          %1457 = vmatprep.subr.mxu0 0.0
          %1458 = vmatpush1.msra.mxu0 0.0
          %1459 = vmatprep.subr.mxu0 0.0
          %1460 = vmatpush1.msra.mxu0 0.0
          %1461 = vmatprep.mubr.f32.mxu0 0.0
          %1462 = vmatmul.mubr.f32.gmra.mrb[0].mxu0 %v1380
          %v1463 = vpop.f32.mrb[0].mxu0
          %v1464 = vadd.f32 0.0, %v1463
          %v1465 = vpop.f32.mrb[0].mxu0
          %1466 = vdwg.mxu0
          %v1467 = vld [vmem:[#allocation4] sm:$0x1]
          %vm1468 = vcmask 64512
          %v1470 = vsel %vm1468, 1.0, 0
          %1472 = vmatprep.subr.mxu0 0.0
          %1473 = vmatpush1.msra.mxu0 %v1464
          %1474 = vmatprep.subr.mxu0 0.0
          %1475 = vmatpush1.msra.mxu0 0.0
          %1476 = vmatprep.subr.mxu0 0.0
          %1477 = vmatpush1.msra.mxu0 0.0
          %1478 = vmatprep.subr.mxu0 0.0
          %1479 = vmatpush1.msra.mxu0 0.0
          %1480 = vmatprep.subr.mxu0 0.0
          %1481 = vmatpush1.msra.mxu0 0.0
          %1482 = vmatprep.subr.mxu0 0.0
          %1483 = vmatpush1.msra.mxu0 0.0
          %1484 = vmatprep.subr.mxu0 0.0
          %1485 = vmatpush1.msra.mxu0 0.0
          %1486 = vmatprep.subr.mxu0 0.0
          %1487 = vmatpush1.msra.mxu0 0.0
          %1488 = vmatprep.subr.mxu0 0.0
          %1489 = vmatpush1.msra.mxu0 0.0
          %1490 = vmatprep.subr.mxu0 0.0
          %1491 = vmatpush1.msra.mxu0 0.0
          %1492 = vmatprep.subr.mxu0 0.0
          %1493 = vmatpush1.msra.mxu0 0.0
          %1494 = vmatprep.subr.mxu0 0.0
          %1495 = vmatpush1.msra.mxu0 0.0
          %1496 = vmatprep.subr.mxu0 0.0
          %1497 = vmatpush1.msra.mxu0 0.0
          %1498 = vmatprep.subr.mxu0 0.0
          %1499 = vmatpush1.msra.mxu0 0.0
          %1500 = vmatprep.subr.mxu0 0.0
          %1501 = vmatpush1.msra.mxu0 0.0
          %1502 = vmatprep.subr.mxu0 0.0
          %1503 = vmatpush1.msra.mxu0 0.0
          %1504 = vmatprep.subr.mxu0 0.0
          %1505 = vmatpush1.msra.mxu0 0.0
          %1506 = vmatprep.subr.mxu0 0.0
          %1507 = vmatpush1.msra.mxu0 0.0
          %1508 = vmatprep.subr.mxu0 0.0
          %1509 = vmatpush1.msra.mxu0 0.0
          %1510 = vmatprep.subr.mxu0 0.0
          %1511 = vmatpush1.msra.mxu0 0.0
          %1512 = vmatprep.subr.mxu0 0.0
          %1513 = vmatpush1.msra.mxu0 0.0
          %1514 = vmatprep.subr.mxu0 0.0
          %1515 = vmatpush1.msra.mxu0 0.0
          %1516 = vmatprep.subr.mxu0 0.0
          %1517 = vmatpush1.msra.mxu0 0.0
          %1518 = vmatprep.subr.mxu0 0.0
          %1519 = vmatpush1.msra.mxu0 0.0
          %1520 = vmatprep.subr.mxu0 0.0
          %1521 = vmatpush1.msra.mxu0 0.0
          %1522 = vmatprep.subr.mxu0 0.0
          %1523 = vmatpush1.msra.mxu0 0.0
          %1524 = vmatprep.subr.mxu0 0.0
          %1525 = vmatpush1.msra.mxu0 0.0
          %1526 = vmatprep.subr.mxu0 0.0
          %1527 = vmatpush1.msra.mxu0 0.0
          %1528 = vmatprep.subr.mxu0 0.0
          %1529 = vmatpush1.msra.mxu0 0.0
          %1530 = vmatprep.subr.mxu0 0.0
          %1531 = vmatpush1.msra.mxu0 0.0
          %1532 = vmatprep.subr.mxu0 0.0
          %1533 = vmatpush1.msra.mxu0 0.0
          %1534 = vmatprep.subr.mxu0 0.0
          %1535 = vmatpush1.msra.mxu0 0.0
          %1536 = vmatprep.mubr.f32.mxu0 0.0
          %1537 = vmatmul.mubr.f32.gmra.mrb[0].mxu0 %v1470
          %v1538 = vpop.f32.mrb[0].mxu0
          %v1539 = vadd.f32 0.0, %v1538
          %v1540 = vpop.f32.mrb[0].mxu0
          %1541 = vdwg.mxu0
          %v1542 = vadd.f32 %v1467, %v1539
          %1543 = vst [vmem:[#allocation4] sm:$0x1] %v1542
          %v1544 = vld [vmem:[#allocation4 + $0x1] sm:$0x1]
          %v1545 = vmul.f32 %v1464, %v1464
          %1546 = vmatprep.subr.mxu0 0.0
          %1547 = vmatpush1.msra.mxu0 %v1545
          %1548 = vmatprep.subr.mxu0 0.0
          %1549 = vmatpush1.msra.mxu0 0.0
          %1550 = vmatprep.subr.mxu0 0.0
          %1551 = vmatpush1.msra.mxu0 0.0
          %1552 = vmatprep.subr.mxu0 0.0
          %1553 = vmatpush1.msra.mxu0 0.0
          %1554 = vmatprep.subr.mxu0 0.0
          %1555 = vmatpush1.msra.mxu0 0.0
          %1556 = vmatprep.subr.mxu0 0.0
          %1557 = vmatpush1.msra.mxu0 0.0
          %1558 = vmatprep.subr.mxu0 0.0
          %1559 = vmatpush1.msra.mxu0 0.0
          %1560 = vmatprep.subr.mxu0 0.0
          %1561 = vmatpush1.msra.mxu0 0.0
          %1562 = vmatprep.subr.mxu0 0.0
          %1563 = vmatpush1.msra.mxu0 0.0
          %1564 = vmatprep.subr.mxu0 0.0
          %1565 = vmatpush1.msra.mxu0 0.0
          %1566 = vmatprep.subr.mxu0 0.0
          %1567 = vmatpush1.msra.mxu0 0.0
          %1568 = vmatprep.subr.mxu0 0.0
          %1569 = vmatpush1.msra.mxu0 0.0
          %1570 = vmatprep.subr.mxu0 0.0
          %1571 = vmatpush1.msra.mxu0 0.0
          %1572 = vmatprep.subr.mxu0 0.0
          %1573 = vmatpush1.msra.mxu0 0.0
          %1574 = vmatprep.subr.mxu0 0.0
          %1575 = vmatpush1.msra.mxu0 0.0
          %1576 = vmatprep.subr.mxu0 0.0
          %1577 = vmatpush1.msra.mxu0 0.0
          %1578 = vmatprep.subr.mxu0 0.0
          %1579 = vmatpush1.msra.mxu0 0.0
          %1580 = vmatprep.subr.mxu0 0.0
          %1581 = vmatpush1.msra.mxu0 0.0
          %1582 = vmatprep.subr.mxu0 0.0
          %1583 = vmatpush1.msra.mxu0 0.0
          %1584 = vmatprep.subr.mxu0 0.0
          %1585 = vmatpush1.msra.mxu0 0.0
          %1586 = vmatprep.subr.mxu0 0.0
          %1587 = vmatpush1.msra.mxu0 0.0
          %1588 = vmatprep.subr.mxu0 0.0
          %1589 = vmatpush1.msra.mxu0 0.0
          %1590 = vmatprep.subr.mxu0 0.0
          %1591 = vmatpush1.msra.mxu0 0.0
          %1592 = vmatprep.subr.mxu0 0.0
          %1593 = vmatpush1.msra.mxu0 0.0
          %1594 = vmatprep.subr.mxu0 0.0
          %1595 = vmatpush1.msra.mxu0 0.0
          %1596 = vmatprep.subr.mxu0 0.0
          %1597 = vmatpush1.msra.mxu0 0.0
          %1598 = vmatprep.subr.mxu0 0.0
          %1599 = vmatpush1.msra.mxu0 0.0
          %1600 = vmatprep.subr.mxu0 0.0
          %1601 = vmatpush1.msra.mxu0 0.0
          %1602 = vmatprep.subr.mxu0 0.0
          %1603 = vmatpush1.msra.mxu0 0.0
          %1604 = vmatprep.subr.mxu0 0.0
          %1605 = vmatpush1.msra.mxu0 0.0
          %1606 = vmatprep.subr.mxu0 0.0
          %1607 = vmatpush1.msra.mxu0 0.0
          %1608 = vmatprep.subr.mxu0 0.0
          %1609 = vmatpush1.msra.mxu0 0.0
          %1610 = vmatprep.mubr.f32.mxu0 0.0
          %1611 = vmatmul.mubr.f32.gmra.mrb[0].mxu0 %v1470
          %v1612 = vpop.f32.mrb[0].mxu0
          %v1613 = vadd.f32 0.0, %v1612
          %v1614 = vpop.f32.mrb[0].mxu0
          %1615 = vdwg.mxu0
          %v1616 = vadd.f32 %v1544, %v1613
          %1617 = vst [vmem:[#allocation4 + $0x1] sm:$0x1] %v1616
        $region104: #{tpu_custom_call.1} parent=59 // pred_fallthru
          _
        // Predicated region
        $region105: #{tpu_custom_call.1} parent=59 // pred_check
          %p1618 = pneg %p476
        $region106: #{tpu_custom_call.1} parent=59 // pred_check_branch
          %1620 = sbr.rel (%p1618) target = $region108
        $region107: #{tpu_custom_call.1} parent=59 // pred_region
          %v1621 = vld [vmem:[#allocation8] sm:$0xff]
          %v1622 = vld [vmem:[#allocation8 + $0x8] sm:$0xff]
          %v1623 = vld [vmem:[#allocation8 + $0x10] sm:$0xff]
          %v1624 = vld [vmem:[#allocation8 + $0x18] sm:$0xff]
          %v1625 = vld [vmem:[#allocation8 + $0x20] sm:$0xff]
          %v1626 = vld [vmem:[#allocation8 + $0x28] sm:$0xff]
          %v1627 = vld [vmem:[#allocation8 + $0x30] sm:$0xff]
          %v1628 = vld [vmem:[#allocation8 + $0x38] sm:$0xff]
          %vm1629 = vcmask 261120
          %v1631 = vsel %vm1629, %v497, 0
          %1633 = vmatprep.subr.mxu0 %v1622
          %1634 = vmatpush1.msra.mxu0 %v1621
          %1635 = vmatprep.subr.mxu0 %v1624
          %1636 = vmatpush1.msra.mxu0 %v1623
          %1637 = vmatprep.subr.mxu0 %v1626
          %1638 = vmatpush1.msra.mxu0 %v1625
          %1639 = vmatprep.subr.mxu0 %v1628
          %1640 = vmatpush1.msra.mxu0 %v1627
          %1641 = vmatprep.subr.mxu0 0.0
          %1642 = vmatpush1.msra.mxu0 0.0
          %1643 = vmatprep.subr.mxu0 0.0
          %1644 = vmatpush1.msra.mxu0 0.0
          %1645 = vmatprep.subr.mxu0 0.0
          %1646 = vmatpush1.msra.mxu0 0.0
          %1647 = vmatprep.subr.mxu0 0.0
          %1648 = vmatpush1.msra.mxu0 0.0
          %1649 = vmatprep.subr.mxu0 0.0
          %1650 = vmatpush1.msra.mxu0 0.0
          %1651 = vmatprep.subr.mxu0 0.0
          %1652 = vmatpush1.msra.mxu0 0.0
          %1653 = vmatprep.subr.mxu0 0.0
          %1654 = vmatpush1.msra.mxu0 0.0
          %1655 = vmatprep.subr.mxu0 0.0
          %1656 = vmatpush1.msra.mxu0 0.0
          %1657 = vmatprep.subr.mxu0 0.0
          %1658 = vmatpush1.msra.mxu0 0.0
          %1659 = vmatprep.subr.mxu0 0.0
          %1660 = vmatpush1.msra.mxu0 0.0
          %1661 = vmatprep.subr.mxu0 0.0
          %1662 = vmatpush1.msra.mxu0 0.0
          %1663 = vmatprep.subr.mxu0 0.0
          %1664 = vmatpush1.msra.mxu0 0.0
          %1665 = vmatprep.subr.mxu0 0.0
          %1666 = vmatpush1.msra.mxu0 0.0
          %1667 = vmatprep.subr.mxu0 0.0
          %1668 = vmatpush1.msra.mxu0 0.0
          %1669 = vmatprep.subr.mxu0 0.0
          %1670 = vmatpush1.msra.mxu0 0.0
          %1671 = vmatprep.subr.mxu0 0.0
          %1672 = vmatpush1.msra.mxu0 0.0
          %1673 = vmatprep.subr.mxu0 0.0
          %1674 = vmatpush1.msra.mxu0 0.0
          %1675 = vmatprep.subr.mxu0 0.0
          %1676 = vmatpush1.msra.mxu0 0.0
          %1677 = vmatprep.subr.mxu0 0.0
          %1678 = vmatpush1.msra.mxu0 0.0
          %1679 = vmatprep.subr.mxu0 0.0
          %1680 = vmatpush1.msra.mxu0 0.0
          %1681 = vmatprep.subr.mxu0 0.0
          %1682 = vmatpush1.msra.mxu0 0.0
          %1683 = vmatprep.subr.mxu0 0.0
          %1684 = vmatpush1.msra.mxu0 0.0
          %1685 = vmatprep.subr.mxu0 0.0
          %1686 = vmatpush1.msra.mxu0 0.0
          %1687 = vmatprep.subr.mxu0 0.0
          %1688 = vmatpush1.msra.mxu0 0.0
          %1689 = vmatprep.subr.mxu0 0.0
          %1690 = vmatpush1.msra.mxu0 0.0
          %1691 = vmatprep.subr.mxu0 0.0
          %1692 = vmatpush1.msra.mxu0 0.0
          %1693 = vmatprep.subr.mxu0 0.0
          %1694 = vmatpush1.msra.mxu0 0.0
          %1695 = vmatprep.subr.mxu0 0.0
          %1696 = vmatpush1.msra.mxu0 0.0
          %1697 = vmatprep.mubr.f32.mxu0 0.0
          %1698 = vmatmul.mubr.f32.gmra.mrb[0].mxu0 %v1631
          %v1699 = vpop.f32.mrb[0].mxu0
          %v1700 = vadd.f32 0.0, %v1699
          %v1701 = vpop.f32.mrb[0].mxu0
          %v1702 = vadd.f32 0.0, %v1701
          %1703 = vdwg.mxu0
          %v1704 = vld [vmem:[#allocation2] ss:$2 sm:$0x3]
          %s1705 = scalar_lea.vmem [#allocation2], 1
          %v1706 = vld [vmem:[%s1705] ss:$2 sm:$0x3]
          %v1708 = vlaneseq
          %v1709 = vshrl.u32 %v1708, 7
          %v1710 = vsub.s32 0, %v1709
          %v1711 = vrot.slane %v1704, %v1710
          %v1712 = vlaneseq
          %v1713 = vshrl.u32 %v1712, 7
          %v1714 = vsub.s32 1, %v1713
          %v1715 = vrot.slane %v1704, %v1714
          %v1718 = vmul.f32 %v1700, %v1711
          %v1719 = vmul.f32 %v1702, %v1715
          %v1721 = vlaneseq
          %v1722 = vshrl.u32 %v1721, 7
          %v1723 = vsub.s32 0, %v1722
          %v1724 = vrot.slane %v1706, %v1723
          %v1725 = vlaneseq
          %v1726 = vshrl.u32 %v1725, 7
          %v1727 = vsub.s32 1, %v1726
          %v1728 = vrot.slane %v1706, %v1727
          %v1731 = vadd.f32 %v1718, %v1724
          %v1732 = vadd.f32 %v1719, %v1728
          %v1733 = vmax.f32 %v1731, 0.0
          %v1734 = vmax.f32 %v1732, 0.0
          %v1735 = vld [vmem:[#allocation10] sm:$0xff]
          %v1736 = vld [vmem:[#allocation10 + $0x8] sm:$0xff]
          %v1737 = vld [vmem:[#allocation10 + $0x10] sm:$0xff]
          %v1738 = vld [vmem:[#allocation10 + $0x18] sm:$0xff]
          %v1739 = vld [vmem:[#allocation10 + $0x20] sm:$0xff]
          %v1740 = vld [vmem:[#allocation10 + $0x28] sm:$0xff]
          %v1741 = vld [vmem:[#allocation10 + $0x30] sm:$0xff]
          %v1742 = vld [vmem:[#allocation10 + $0x38] sm:$0xff]
          %v1743 = vld [vmem:[#allocation10 + $0x40] sm:$0xff]
          %v1744 = vld [vmem:[#allocation10 + $0x48] sm:$0xff]
          %v1745 = vld [vmem:[#allocation10 + $0x50] sm:$0xff]
          %v1746 = vld [vmem:[#allocation10 + $0x58] sm:$0xff]
          %v1747 = vld [vmem:[#allocation10 + $0x60] sm:$0xff]
          %v1748 = vld [vmem:[#allocation10 + $0x68] sm:$0xff]
          %v1749 = vld [vmem:[#allocation10 + $0x70] sm:$0xff]
          %v1750 = vld [vmem:[#allocation10 + $0x78] sm:$0xff]
          %v1751 = vld [vmem:[#allocation10 + $0x80] sm:$0xff]
          %v1752 = vld [vmem:[#allocation10 + $0x88] sm:$0xff]
          %v1753 = vld [vmem:[#allocation10 + $0x90] sm:$0xff]
          %v1754 = vld [vmem:[#allocation10 + $0x98] sm:$0xff]
          %v1755 = vld [vmem:[#allocation10 + $0xa0] sm:$0xff]
          %v1756 = vld [vmem:[#allocation10 + $0xa8] sm:$0xff]
          %v1757 = vld [vmem:[#allocation10 + $0xb0] sm:$0xff]
          %v1758 = vld [vmem:[#allocation10 + $0xb8] sm:$0xff]
          %v1759 = vld [vmem:[#allocation10 + $0xc0] sm:$0xff]
          %v1760 = vld [vmem:[#allocation10 + $0xc8] sm:$0xff]
          %v1761 = vld [vmem:[#allocation10 + $0xd0] sm:$0xff]
          %v1762 = vld [vmem:[#allocation10 + $0xd8] sm:$0xff]
          %v1763 = vld [vmem:[#allocation10 + $0xe0] sm:$0xff]
          %v1764 = vld [vmem:[#allocation10 + $0xe8] sm:$0xff]
          %v1765 = vld [vmem:[#allocation10 + $0xf0] sm:$0xff]
          %v1766 = vld [vmem:[#allocation10 + $0xf8] sm:$0xff]
          %1767 = vmatprep.subr.mxu0 0.0
          %1768 = vmatpush1.msra.mxu0 %v1735
          %1769 = vmatprep.subr.mxu0 0.0
          %1770 = vmatpush1.msra.mxu0 %v1736
          %1771 = vmatprep.subr.mxu0 0.0
          %1772 = vmatpush1.msra.mxu0 %v1737
          %1773 = vmatprep.subr.mxu0 0.0
          %1774 = vmatpush1.msra.mxu0 %v1738
          %1775 = vmatprep.subr.mxu0 0.0
          %1776 = vmatpush1.msra.mxu0 %v1739
          %1777 = vmatprep.subr.mxu0 0.0
          %1778 = vmatpush1.msra.mxu0 %v1740
          %1779 = vmatprep.subr.mxu0 0.0
          %1780 = vmatpush1.msra.mxu0 %v1741
          %1781 = vmatprep.subr.mxu0 0.0
          %1782 = vmatpush1.msra.mxu0 %v1742
          %1783 = vmatprep.subr.mxu0 0.0
          %1784 = vmatpush1.msra.mxu0 %v1743
          %1785 = vmatprep.subr.mxu0 0.0
          %1786 = vmatpush1.msra.mxu0 %v1744
          %1787 = vmatprep.subr.mxu0 0.0
          %1788 = vmatpush1.msra.mxu0 %v1745
          %1789 = vmatprep.subr.mxu0 0.0
          %1790 = vmatpush1.msra.mxu0 %v1746
          %1791 = vmatprep.subr.mxu0 0.0
          %1792 = vmatpush1.msra.mxu0 %v1747
          %1793 = vmatprep.subr.mxu0 0.0
          %1794 = vmatpush1.msra.mxu0 %v1748
          %1795 = vmatprep.subr.mxu0 0.0
          %1796 = vmatpush1.msra.mxu0 %v1749
          %1797 = vmatprep.subr.mxu0 0.0
          %1798 = vmatpush1.msra.mxu0 %v1750
          %1799 = vmatprep.subr.mxu0 0.0
          %1800 = vmatpush1.msra.mxu0 %v1751
          %1801 = vmatprep.subr.mxu0 0.0
          %1802 = vmatpush1.msra.mxu0 %v1752
          %1803 = vmatprep.subr.mxu0 0.0
          %1804 = vmatpush1.msra.mxu0 %v1753
          %1805 = vmatprep.subr.mxu0 0.0
          %1806 = vmatpush1.msra.mxu0 %v1754
          %1807 = vmatprep.subr.mxu0 0.0
          %1808 = vmatpush1.msra.mxu0 %v1755
          %1809 = vmatprep.subr.mxu0 0.0
          %1810 = vmatpush1.msra.mxu0 %v1756
          %1811 = vmatprep.subr.mxu0 0.0
          %1812 = vmatpush1.msra.mxu0 %v1757
          %1813 = vmatprep.subr.mxu0 0.0
          %1814 = vmatpush1.msra.mxu0 %v1758
          %1815 = vmatprep.subr.mxu0 0.0
          %1816 = vmatpush1.msra.mxu0 %v1759
          %1817 = vmatprep.subr.mxu0 0.0
          %1818 = vmatpush1.msra.mxu0 %v1760
          %1819 = vmatprep.subr.mxu0 0.0
          %1820 = vmatpush1.msra.mxu0 %v1761
          %1821 = vmatprep.subr.mxu0 0.0
          %1822 = vmatpush1.msra.mxu0 %v1762
          %1823 = vmatprep.subr.mxu0 0.0
          %1824 = vmatpush1.msra.mxu0 %v1763
          %1825 = vmatprep.subr.mxu0 0.0
          %1826 = vmatpush1.msra.mxu0 %v1764
          %1827 = vmatprep.subr.mxu0 0.0
          %1828 = vmatpush1.msra.mxu0 %v1765
          %1829 = vmatprep.subr.mxu0 0.0
          %1830 = vmatpush1.msra.mxu0 %v1766
          %1831 = vmatprep.mubr.f32.mxu0 %v1734
          %1832 = vmatmul.mubr.f32.gmra.mrb[0].mxu0 %v1733
          %v1833 = vpop.f32.mrb[0].mxu0
          %v1834 = vadd.f32 0.0, %v1833
          %v1835 = vpop.f32.mrb[0].mxu0
          %1836 = vdwg.mxu0
          %v1837 = vld [vmem:[#allocation3] sm:$0x1]
          %v1838 = vld [vmem:[#allocation3 + $0x1] sm:$0x1]
          %v1839 = vlaneseq
          %v1840 = vshrl.u32 %v1839, 7
          %v1841 = vsub.s32 0, %v1840
          %v1842 = vrot.slane %v1837, %v1841
          %v1843 = vmul.f32 %v1834, %v1842
          %v1844 = vlaneseq
          %v1845 = vshrl.u32 %v1844, 7
          %v1846 = vsub.s32 0, %v1845
          %v1847 = vrot.slane %v1838, %v1846
          %v1848 = vadd.f32 %v1843, %v1847
          %v1849 = vmax.f32 %v1848, 0.0
          %v1850 = vld [vmem:[#allocation11] sm:$0xff]
          %v1851 = vld [vmem:[#allocation11 + $0x8] sm:$0xff]
          %v1852 = vld [vmem:[#allocation11 + $0x10] sm:$0xff]
          %v1853 = vld [vmem:[#allocation11 + $0x18] sm:$0xff]
          %v1854 = vld [vmem:[#allocation11 + $0x20] sm:$0xff]
          %v1855 = vld [vmem:[#allocation11 + $0x28] sm:$0xff]
          %v1856 = vld [vmem:[#allocation11 + $0x30] sm:$0xff]
          %v1857 = vld [vmem:[#allocation11 + $0x38] sm:$0xff]
          %v1858 = vld [vmem:[#allocation11 + $0x40] sm:$0xff]
          %v1859 = vld [vmem:[#allocation11 + $0x48] sm:$0xff]
          %v1860 = vld [vmem:[#allocation11 + $0x50] sm:$0xff]
          %v1861 = vld [vmem:[#allocation11 + $0x58] sm:$0xff]
          %v1862 = vld [vmem:[#allocation11 + $0x60] sm:$0xff]
          %v1863 = vld [vmem:[#allocation11 + $0x68] sm:$0xff]
          %v1864 = vld [vmem:[#allocation11 + $0x70] sm:$0xff]
          %v1865 = vld [vmem:[#allocation11 + $0x78] sm:$0xff]
          %1866 = vmatprep.subr.mxu0 0.0
          %1867 = vmatpush1.msra.mxu0 %v1850
          %1868 = vmatprep.subr.mxu0 0.0
          %1869 = vmatpush1.msra.mxu0 %v1851
          %1870 = vmatprep.subr.mxu0 0.0
          %1871 = vmatpush1.msra.mxu0 %v1852
          %1872 = vmatprep.subr.mxu0 0.0
          %1873 = vmatpush1.msra.mxu0 %v1853
          %1874 = vmatprep.subr.mxu0 0.0
          %1875 = vmatpush1.msra.mxu0 %v1854
          %1876 = vmatprep.subr.mxu0 0.0
          %1877 = vmatpush1.msra.mxu0 %v1855
          %1878 = vmatprep.subr.mxu0 0.0
          %1879 = vmatpush1.msra.mxu0 %v1856
          %1880 = vmatprep.subr.mxu0 0.0
          %1881 = vmatpush1.msra.mxu0 %v1857
          %1882 = vmatprep.subr.mxu0 0.0
          %1883 = vmatpush1.msra.mxu0 %v1858
          %1884 = vmatprep.subr.mxu0 0.0
          %1885 = vmatpush1.msra.mxu0 %v1859
          %1886 = vmatprep.subr.mxu0 0.0
          %1887 = vmatpush1.msra.mxu0 %v1860
          %1888 = vmatprep.subr.mxu0 0.0
          %1889 = vmatpush1.msra.mxu0 %v1861
          %1890 = vmatprep.subr.mxu0 0.0
          %1891 = vmatpush1.msra.mxu0 %v1862
          %1892 = vmatprep.subr.mxu0 0.0
          %1893 = vmatpush1.msra.mxu0 %v1863
          %1894 = vmatprep.subr.mxu0 0.0
          %1895 = vmatpush1.msra.mxu0 %v1864
          %1896 = vmatprep.subr.mxu0 0.0
          %1897 = vmatpush1.msra.mxu0 %v1865
          %1898 = vmatprep.subr.mxu0 0.0
          %1899 = vmatpush1.msra.mxu0 0.0
          %1900 = vmatprep.subr.mxu0 0.0
          %1901 = vmatpush1.msra.mxu0 0.0
          %1902 = vmatprep.subr.mxu0 0.0
          %1903 = vmatpush1.msra.mxu0 0.0
          %1904 = vmatprep.subr.mxu0 0.0
          %1905 = vmatpush1.msra.mxu0 0.0
          %1906 = vmatprep.subr.mxu0 0.0
          %1907 = vmatpush1.msra.mxu0 0.0
          %1908 = vmatprep.subr.mxu0 0.0
          %1909 = vmatpush1.msra.mxu0 0.0
          %1910 = vmatprep.subr.mxu0 0.0
          %1911 = vmatpush1.msra.mxu0 0.0
          %1912 = vmatprep.subr.mxu0 0.0
          %1913 = vmatpush1.msra.mxu0 0.0
          %1914 = vmatprep.subr.mxu0 0.0
          %1915 = vmatpush1.msra.mxu0 0.0
          %1916 = vmatprep.subr.mxu0 0.0
          %1917 = vmatpush1.msra.mxu0 0.0
          %1918 = vmatprep.subr.mxu0 0.0
          %1919 = vmatpush1.msra.mxu0 0.0
          %1920 = vmatprep.subr.mxu0 0.0
          %1921 = vmatpush1.msra.mxu0 0.0
          %1922 = vmatprep.subr.mxu0 0.0
          %1923 = vmatpush1.msra.mxu0 0.0
          %1924 = vmatprep.subr.mxu0 0.0
          %1925 = vmatpush1.msra.mxu0 0.0
          %1926 = vmatprep.subr.mxu0 0.0
          %1927 = vmatpush1.msra.mxu0 0.0
          %1928 = vmatprep.subr.mxu0 0.0
          %1929 = vmatpush1.msra.mxu0 0.0
          %1930 = vmatprep.mubr.f32.mxu0 0.0
          %1931 = vmatmul.mubr.f32.gmra.mrb[0].mxu0 %v1849
          %v1932 = vpop.f32.mrb[0].mxu0
          %v1933 = vadd.f32 0.0, %v1932
          %v1934 = vpop.f32.mrb[0].mxu0
          %1935 = vdwg.mxu0
          %v1936 = vld [vmem:[#allocation4] sm:$0x1]
          %v1937 = vld [vmem:[#allocation4 + $0x1] sm:$0x1]
          %v1938 = vlaneseq
          %v1939 = vshrl.u32 %v1938, 7
          %v1940 = vsub.s32 0, %v1939
          %v1941 = vrot.slane %v1936, %v1940
          %v1942 = vmul.f32 %v1933, %v1941
          %v1943 = vlaneseq
          %v1944 = vshrl.u32 %v1943, 7
          %v1945 = vsub.s32 0, %v1944
          %v1946 = vrot.slane %v1937, %v1945
          %v1947 = vadd.f32 %v1942, %v1946
          %v1948 = vmax.f32 %v1947, 0.0
          %1949 = vst [vmem:[%s417] sm:$0xff] %v1948
        $region108: #{tpu_custom_call.1} parent=59 // pred_fallthru
          _
        %s1950 = sand.u32 %s266, 1
        %s1951 = scalar_lea.sflag [#allocation7], %s1950
        %s1952 = sand.u32 %s266, 1
        %s1953 = smul.addr %s1952, 8
        %s1954 = scalar_lea.vmem [#allocation13], %s1953
        // Predicated region
        $region109: #{tpu_custom_call.1} parent=59 // pred_check
          %p1955 = pneg %p276
        $region110: #{tpu_custom_call.1} parent=59 // pred_check_branch
          %1957 = sbr.rel (%p1955) target = $region112
        $region111: #{tpu_custom_call.1} parent=59 // pred_region
          %p1958 = scmp.eq.s32.totalorder %s31, 3
          %s1959 = scalar_select %p1958, %s32, 0
          %s1961 = ssub.s32 128, 128
          %1962 = vsyncadd %s1951, %s1961
          %s1963 = smul.addr %s1959, 128
          %s1964 = scalar_lea.hbm %s10, %s1963
          %s1966 = sshll.u32 %s1954, 4
          %s1967 = int_to_ptr.vmem [resolvable:$true] %s1966
          %1969 = dma.vmem_to_hbm [thread:$0]  %s1967, 128, %s1964, %s1951
        $region112: #{tpu_custom_call.1} parent=59 // pred_fallthru
          _
      $region60: #{tpu_custom_call.1} parent=5 // pred_fallthru
        _
      %p1970 = scmp.le.s32.totalorder 2, %s22
      // Predicated region
      $region113: #{tpu_custom_call.1} parent=5 // pred_check
        %p1971 = pneg %p1970
      $region114: #{tpu_custom_call.1} parent=5 // pred_check_branch
        %1973 = sbr.rel (%p1971) target = $region116
      $region115: #{tpu_custom_call.1} parent=5 // pred_region
        %s1974 = ssub.s32 %s22, 2
        // Predicated region
        $region117: #{tpu_custom_call.1} parent=115 // pred_check
          %p1975 = pneg %p282
        $region118: #{tpu_custom_call.1} parent=115 // pred_check_branch
          %1977 = sbr.rel (%p1975) target = $region120
        $region119: #{tpu_custom_call.1} parent=115 // pred_region
          %s1978 = sand.u32 %s267, 1
          %s1979 = scalar_lea.sflag [#allocation7], %s1978
          %s1980 = sand.u32 %s267, 1
          %s1981 = smul.addr %s1980, 8
          %s1982 = scalar_lea.vmem [#allocation13], %s1981
          %1983 = dma.done %s1979, 128
        $region120: #{tpu_custom_call.1} parent=115 // pred_fallthru
          _
      $region116: #{tpu_custom_call.1} parent=5 // pred_fallthru
        _
    $region6: #{tpu_custom_call.1} parent=1 // loop_footer
      %s26 = sadd.s32 1, %s22
    $region7: #{tpu_custom_call.1} parent=1 // loop_footer_branch
      %21 = sbr.rel target = $region3
    $region8: #{tpu_custom_call.1} parent=1 // loop_exit
      _
    %1984 = vsyncpa [#allocation6], 1
    %s1985 = scalar_lea.sflag [#allocation6], 1
    %1986 = vsyncpa %s1985, 1
    %1987 = vsyncpa [#allocation9], 1
    %1988 = vsyncpa [#allocation12], 1
    %1989 = vsyncpa [#allocation7], 1
    %s1990 = scalar_lea.sflag [#allocation7], 1
    %1991 = vsyncpa %s1990, 1

</llo_original>
